<compile_context>
chip_gen: v7x
topology: tpu7x:2x2x1
jax: 0.10.0
libtpu: 0.0.40
codegen_flags: <defaults>
</compile_context>

<pallas_src>
import functools

import jax
import jax.numpy as jnp
import numpy as np
from jax.experimental import pallas as pl
from jax.experimental.pallas import tpu as pltpu

NEG = -1e30  # finite stand-in for -inf in the additive attention mask (kept f32)


# ---------------------------------------------------------------------------
# Fused kernel: one encoder layer per inner grid step, x resident in VMEM
# ---------------------------------------------------------------------------
def _fused_encoder_kernel(K, nhead, mxu_dtype,
                          x0_ref, pad_ref,
                          wqkv_ref, bqkv_ref, wo_ref, vec_ref,
                          w1_ref, b1_ref, w2_ref,
                          out_ref, x_ref):
    """grid = (batch_blocks [parallel], nlayers [arbitrary]).

    x0_ref   (bb, L, E)    initial tokens = [latent(node) ; text], f32
    pad_ref  (bb, 1, L)    additive key-padding bias (0 / NEG), f32
    wqkv_ref (E, 3E)       fused [wq*scale | wk | wv] of this layer, bf16
    bqkv_ref (1, 3E)       fused [bq*scale | bk | bv], f32
    wo_ref   (E, E)        output projection, bf16
    vec_ref  (6, E)        rows = [bo, ln1_g, ln1_b, ln2_g, ln2_b, b2], f32
    w1_ref   (E, H) bf16, b1_ref (1, H) f32, w2_ref (H, E) bf16
    out_ref  (bb, L, E)    written whole at the last layer only
    x_ref    (bb, L, E)    f32 VMEM scratch: activations carried across layers
    """
    l = pl.program_id(1)
    nl = pl.num_programs(1)
    bb, L, E = x_ref.shape
    hd = E // nhead
    f32 = jnp.float32

    def mm(a, w):         # activation (f32) x packed bf16 weight, f32 accumulate
        return jnp.dot(a.astype(w.dtype), w, preferred_element_type=f32)

    def amm(eq, a, b):    # activation x activation batched matmul on the MXU
        return jnp.einsum(eq, a.astype(mxu_dtype), b.astype(mxu_dtype),
                          preferred_element_type=f32)

    # ---- first layer for this batch block: load activations into scratch ----
    @pl.when(l == 0)
    def _init():
        x_ref[...] = x0_ref[...]

    x = x_ref[...]                                        # (bb, L, E), f32
    x2 = x.reshape(bb * L, E)

    wqkv = wqkv_ref[...]
    bqkv = bqkv_ref[...]
    wo = wo_ref[...]
    vec = vec_ref[...]
    bo, g1, be1 = vec[0:1, :], vec[1:2, :], vec[2:3, :]
    g2, be2, b2 = vec[3:4, :], vec[4:5, :], vec[5:6, :]
    w1, b1, w2 = w1_ref[...], b1_ref[...], w2_ref[...]

    # ---- fused QKV projection: one lane-dense (bb*L,E)@(E,3E) matmul --------
    qkv = (mm(x2, wqkv) + bqkv).reshape(bb, L, 3 * E)     # f32; scale in wq/bq

    # ---- additive attention bias rebuilt in-kernel (no (B,L,L) HBM stream) --
    rows = jax.lax.broadcasted_iota(jnp.int32, (L, L), 0)
    cols = jax.lax.broadcasted_iota(jnp.int32, (L, L), 1)
    latent_blind = jnp.where((rows < K) & (cols >= K),
                             jnp.float32(NEG), jnp.float32(0.0))        # (L, L)
    bias = latent_blind[None, :, :] + pad_ref[...]        # (bb, L, L), hoisted

    # ---- multi-head self attention -----------------------------------------
    # Scores / PV are intrinsically per-head (hd-wide); heads are a short
    # static loop over known-good single-batch-dim einsums.  Projections are
    # already fused above / below.
    a_heads = []
    for h in range(nhead):
        q = qkv[:, :, h * hd:(h + 1) * hd]                # (bb, L, hd)
        k = qkv[:, :, E + h * hd:E + (h + 1) * hd]
        v = qkv[:, :, 2 * E + h * hd:2 * E + (h + 1) * hd]
        s = amm('bqd,bkd->bqk', q, k) + bias              # (bb, L, L), f32
        s = s - jnp.max(s, axis=-1, keepdims=True)        # keeps masked rows finite
        p = jnp.exp(s)
        p = p * pl.reciprocal(jnp.sum(p, axis=-1, keepdims=True), approx=True)
        a_heads.append(amm('bqk,bkd->bqd', p, v))         # (bb, L, hd)
    a = jnp.concatenate(a_heads, axis=-1).reshape(bb * L, E)
    attn = (mm(a, wo) + bo).reshape(bb, L, E)             # single K=E projection

    # ---- residual + LayerNorm 1 (dropout == identity in eval) --------------
    y = x + attn
    mu = jnp.mean(y, axis=-1, keepdims=True)
    var = jnp.mean((y - mu) ** 2, axis=-1, keepdims=True)
    y = (y - mu) * jax.lax.rsqrt(var + 1e-5) * g1[None] + be1[None]

    # ---- feed forward (ReLU); h1 kept bf16 to halve its live footprint -----
    y2 = y.reshape(bb * L, E)
    h1 = jnp.maximum(mm(y2, w1) + b1, 0.0).astype(mxu_dtype)
    ff = (mm(h1, w2) + b2).reshape(bb, L, E)

    # ---- residual + LayerNorm 2 ---------------------------------------------
    z = y + ff
    mu2 = jnp.mean(z, axis=-1, keepdims=True)
    var2 = jnp.mean((z - mu2) ** 2, axis=-1, keepdims=True)
    z = (z - mu2) * jax.lax.rsqrt(var2 + 1e-5) * g2[None] + be2[None]

    x_ref[...] = z                                        # carry to next layer

    @pl.when(l == nl - 1)
    def _finalize():                                      # one aligned writeback
        out_ref[...] = z.astype(out_ref.dtype)


# ---------------------------------------------------------------------------
# Weight re-layout for the fused kernel (bf16 MXU weights, f32 vectors)
# ---------------------------------------------------------------------------
def _pack_params(params, nhead, mxu_dtype):
    layers = params["layers"]
    E = layers[0]["wq"].shape[0]
    hd = E // nhead
    scale = jnp.float32(1.0 / np.sqrt(hd))

    wqkv, bqkv, wo, vec, w1, b1, w2 = [], [], [], [], [], [], []
    for p in layers:
        wqkv.append(jnp.concatenate([p["wq"] * scale, p["wk"], p["wv"]],
                                    axis=1).astype(mxu_dtype))            # (E, 3E)
        bqkv.append(jnp.concatenate([p["bq"] * scale, p["bk"], p["bv"]],
                                    axis=1))                              # (1, 3E) f32
        wo.append(p["wo"].astype(mxu_dtype))                              # (E, E)
        vec.append(jnp.concatenate(
            [p["bo"], p["g1"], p["be1"], p["g2"], p["be2"], p["b2"]], axis=0))
        w1.append(p["w1"].astype(mxu_dtype))
        b1.append(p["b1"])
        w2.append(p["w2"].astype(mxu_dtype))
    return dict(wqkv=jnp.stack(wqkv), bqkv=jnp.stack(bqkv), wo=jnp.stack(wo),
                vec=jnp.stack(vec), w1=jnp.stack(w1), b1=jnp.stack(b1),
                w2=jnp.stack(w2))


# ---------------------------------------------------------------------------
# Wrapper: full CrossAttentionTransformer forward (one pallas_call)
# ---------------------------------------------------------------------------
def cross_attention_transformer_forward(node_emb, token_emb, token_mask, params, *,
                                         K, nhead, num_batch_blocks=1,
                                         mxu_dtype=jnp.bfloat16,
                                         vmem_limit_bytes=64 * 1024 * 1024):
    # num_batch_blocks: 1 on single-TensorCore chips (v5e/v6e); 2 on v7x to
    # shard the batch over both TensorCores (odd B is padded up, not dropped).
    B, S, E = token_emb.shape
    L = K + S

    kp = _pack_params(params, nhead, mxu_dtype)
    nlayers = kp["wqkv"].shape[0]
    H = kp["w1"].shape[-1]

    # node_lin + latent-token reshape + concat: tiny, left to XLA (no launch).
    nflat = jnp.dot(node_emb.astype(mxu_dtype), params["node_w"].astype(mxu_dtype),
                    preferred_element_type=jnp.float32) + params["node_b"]
    x0 = jnp.concatenate([nflat.reshape(B, K, E),
                          token_emb.astype(jnp.float32)], axis=1)       # (B, L, E)

    # Only the O(B*L) key-pad bias crosses HBM (True == padded -> NEG).
    pad_bias = jnp.concatenate(
        [jnp.zeros((B, K), jnp.float32),
         jnp.where(token_mask, jnp.float32(NEG), jnp.float32(0.0))],
        axis=1).reshape(B, 1, L)

    nbb = max(1, int(num_batch_blocks))
    B_pad = ((B + nbb - 1) // nbb) * nbb
    if B_pad != B:                         # pad batch up instead of dropping nbb
        padn = B_pad - B
        x0 = jnp.concatenate([x0, jnp.zeros((padn, L, E), jnp.float32)], axis=0)
        pad_bias = jnp.concatenate(
            [pad_bias, jnp.zeros((padn, 1, L), jnp.float32)], axis=0)
    bb = B_pad // nbb

    kernel = functools.partial(_fused_encoder_kernel, K, nhead, mxu_dtype)
    grid = (nbb, nlayers)
    in_specs = [
        pl.BlockSpec((bb, L, E), lambda b, l: (b, 0, 0)),               # x0
        pl.BlockSpec((bb, 1, L), lambda b, l: (b, 0, 0)),               # pad bias
        pl.BlockSpec((None, E, 3 * E), lambda b, l: (l, 0, 0)),         # Wqkv (bf16)
        pl.BlockSpec((None, 1, 3 * E), lambda b, l: (l, 0, 0)),         # bqkv
        pl.BlockSpec((None, E, E), lambda b, l: (l, 0, 0)),             # Wo (bf16)
        pl.BlockSpec((None, 6, E), lambda b, l: (l, 0, 0)),             # packed vecs
        pl.BlockSpec((None, E, H), lambda b, l: (l, 0, 0)),             # W1 (bf16)
        pl.BlockSpec((None, 1, H), lambda b, l: (l, 0, 0)),             # b1
        pl.BlockSpec((None, H, E), lambda b, l: (l, 0, 0)),             # W2 (bf16)
    ]
    out_specs = pl.BlockSpec((bb, L, E), lambda b, l: (b, 0, 0))

    out_full = pl.pallas_call(
        kernel,
        out_shape=jax.ShapeDtypeStruct((B_pad, L, E), jnp.float32),
        grid=grid,
        in_specs=in_specs,
        out_specs=out_specs,
        scratch_shapes=[pltpu.VMEM((bb, L, E), jnp.float32)],
        compiler_params=pltpu.CompilerParams(
            dimension_semantics=("parallel", "arbitrary"),
            vmem_limit_bytes=vmem_limit_bytes),
    )(x0, pad_bias, kp["wqkv"], kp["bqkv"], kp["wo"], kp["vec"],
      kp["w1"], kp["b1"], kp["w2"])

    # latent rows + batch padding sliced off by XLA (keeps the kernel store
    # a straight, sublane-aligned full-block write)
    return out_full[:B, K:, :]


# ---------------------------------------------------------------------------
# Pure-JAX reference (same math, same bf16-on-MXU casts) for validation
# ---------------------------------------------------------------------------
def reference_forward(node_emb, token_emb, token_mask, params, *, K, nhead,
                      mxu_dtype=jnp.bfloat16):
    B, S, E = token_emb.shape
    L = K + S
    hd = E // nhead
    scale = 1.0 / float(np.sqrt(hd))

    def mm(a, b):
        return jnp.dot(a.astype(mxu_dtype), b.astype(mxu_dtype),
                       preferred_element_type=jnp.float32)

    nflat = mm(node_emb, params["node_w"]) + params["node_b"]
    x = jnp.concatenate([nflat.reshape(B, K, E), token_emb], axis=1)

    attn_mask = jnp.zeros((L, L), jnp.float32).at[:K, K:].set(NEG)
    key_pad = jnp.concatenate([jnp.zeros((B, K), dtype=jnp.bool_), token_mask], axis=1)
    bias = attn_mask[None] + jnp.where(key_pad, NEG, 0.0)[:, None, :]   # (B, L, L)

    def layer(x, p):
        x2 = x.reshape(B * L, E)
        q = ((mm(x2, p["wq"]) + p["bq"]) * scale).reshape(B, L, nhead, hd).transpose(0, 2, 1, 3)
        k = (mm(x2, p["wk"]) + p["bk"]).reshape(B, L, nhead, hd).transpose(0, 2, 1, 3)
        v = (mm(x2, p["wv"]) + p["bv"]).reshape(B, L, nhead, hd).transpose(0, 2, 1, 3)
        s = jnp.einsum("bhqd,bhkd->bhqk", q.astype(mxu_dtype), k.astype(mxu_dtype),
                       preferred_element_type=jnp.float32) + bias[:, None]
        p_attn = jax.nn.softmax(s, axis=-1)
        a = jnp.einsum("bhqk,bhkd->bhqd", p_attn.astype(mxu_dtype), v.astype(mxu_dtype),
                       preferred_element_type=jnp.float32)
        a = a.transpose(0, 2, 1, 3).reshape(B * L, E)
        a = mm(a, p["wo"]) + p["bo"]
        y = x + a.reshape(B, L, E)
        mu = jnp.mean(y, -1, keepdims=True)
        var = jnp.mean((y - mu) ** 2, -1, keepdims=True)
        y = (y - mu) * jax.lax.rsqrt(var + 1e-5) * p["g1"][0] + p["be1"][0]
        h1 = jnp.maximum(mm(y.reshape(B * L, E), p["w1"]) + p["b1"], 0.0)
        ff = (mm(h1, p["w2"]) + p["b2"]).reshape(B, L, E)
        z = y + ff
        mu2 = jnp.mean(z, -1, keepdims=True)
        var2 = jnp.mean((z - mu2) ** 2, -1, keepdims=True)
        return (z - mu2) * jax.lax.rsqrt(var2 + 1e-5) * p["g2"][0] + p["be2"][0]

    for lp in params["layers"]:
        x = layer(x, lp)
    return x[:, K:, :]


# ---------------------------------------------------------------------------
# Deterministic parameter init (synthetic weights, not a checkpoint)
# ---------------------------------------------------------------------------
def init_params(key, nlayers, node_emb_K, node_dim, token_dim, nhid):
    E, H = token_dim, nhid
    keys = jax.random.split(key, 1 + nlayers)

    def w(k, fi, fo):
        return jax.random.normal(k, (fi, fo), jnp.float32) * 0.1

    def b(k, n):
        return jax.random.normal(k, (1, n), jnp.float32) * 0.05

    k_nw, k_nb = jax.random.split(keys[0])
    params = {
        "node_w": w(k_nw, node_dim, node_emb_K * E),
        "node_b": b(k_nb, node_emb_K * E),
        "layers": [],
    }
    for i in range(nlayers):
        ks = jax.random.split(keys[1 + i], 12)
        params["layers"].append(dict(
            wq=w(ks[0], E, E), bq=b(ks[1], E),
            wk=w(ks[2], E, E), bk=b(ks[3], E),
            wv=w(ks[4], E, E), bv=b(ks[5], E),
            wo=w(ks[6], E, E), bo=b(ks[7], E),
            g1=jnp.ones((1, E), jnp.float32), be1=jnp.zeros((1, E), jnp.float32),
            w1=w(ks[8], E, H), b1=b(ks[9], H),
            w2=w(ks[10], H, E), b2=b(ks[11], E),
            g2=jnp.ones((1, E), jnp.float32), be2=jnp.zeros((1, E), jnp.float32),
        ))
    return params


# ---------------------------------------------------------------------------
if __name__ == "__main__":
    # small shapes consistent with the module
    nlayers, K, node_dim, token_dim, nhead, nhid = 2, 2, 8, 32, 4, 64
    B, S = 2, 6

    key = jax.random.PRNGKey(0)
    k_p, k_node, k_tok = jax.random.split(key, 3)

    params = init_params(k_p, nlayers, K, node_dim, token_dim, nhid)
    node_emb = jax.random.normal(k_node, (B, node_dim), jnp.float32)
    token_emb = jax.random.normal(k_tok, (B, S, token_dim), jnp.float32)
    # padding mask: True == padded; pad the last token of batch element 1
    token_mask = jnp.zeros((B, S), dtype=jnp.bool_).at[1, S - 1].set(True)

    fwd = jax.jit(functools.partial(
        cross_attention_transformer_forward, K=K, nhead=nhead))
    out = jax.block_until_ready(fwd(node_emb, token_emb, token_mask, params))
    assert out.shape == (B, S, token_dim), out.shape

    ref = jax.block_until_ready(
        reference_forward(node_emb, token_emb, token_mask, params, K=K, nhead=nhead))
    np.testing.assert_allclose(np.asarray(out), np.asarray(ref),
                               rtol=2e-2, atol=2e-2)
    print("KERNEL_OK")
</pallas_src>

<mosaic_0001>
module attributes {stable_mosaic.version = 11 : i64} {
  func.func @_fused_encoder_kernel(%arg0: i32, %arg1: i32, %arg2: memref<2x8x32xf32, #tpu.memory_space<vmem>>, %arg3: memref<2x1x8xf32, #tpu.memory_space<vmem>>, %arg4: memref<1x32x96xbf16, #tpu.memory_space<vmem>>, %arg5: memref<1x1x96xf32, #tpu.memory_space<vmem>>, %arg6: memref<1x32x32xbf16, #tpu.memory_space<vmem>>, %arg7: memref<1x6x32xf32, #tpu.memory_space<vmem>>, %arg8: memref<1x32x64xbf16, #tpu.memory_space<vmem>>, %arg9: memref<1x1x64xf32, #tpu.memory_space<vmem>>, %arg10: memref<1x64x32xbf16, #tpu.memory_space<vmem>>, %arg11: memref<2x8x32xf32, #tpu.memory_space<vmem>>, %arg12: memref<2x8x32xf32, #tpu.memory_space<vmem>>) attributes {dimension_semantics = [#tpu.dimension_semantics<parallel>, #tpu.dimension_semantics<arbitrary>], iteration_bounds = array<i64: 1, 2>, scalar_prefetch = 0 : i64, scratch_operands = 1 : i64, tpu.core_type = #tpu.core_type<tc>, window_params = [{transform_indices = @transform_0, window_bounds = array<i64: 2, 8, 32>}, {transform_indices = @transform_1, window_bounds = array<i64: 2, 1, 8>}, {transform_indices = @transform_2, window_bounds = array<i64: 1, 32, 96>}, {transform_indices = @transform_3, window_bounds = array<i64: 1, 1, 96>}, {transform_indices = @transform_4, window_bounds = array<i64: 1, 32, 32>}, {transform_indices = @transform_5, window_bounds = array<i64: 1, 6, 32>}, {transform_indices = @transform_6, window_bounds = array<i64: 1, 32, 64>}, {transform_indices = @transform_7, window_bounds = array<i64: 1, 1, 64>}, {transform_indices = @transform_8, window_bounds = array<i64: 1, 64, 32>}, {transform_indices = @transform_9, window_bounds = array<i64: 2, 8, 32>}]} {
    %c0_i32 = arith.constant 0 : i32
    %0 = arith.cmpi eq, %arg1, %c0_i32 : i32
    %1 = arith.extui %0 : i1 to i32
    %c0_i32_0 = arith.constant 0 : i32
    %2 = arith.cmpi ne, %1, %c0_i32_0 : i32
    scf.if %2 {
      %c0_64 = arith.constant 0 : index
      %c0_65 = arith.constant 0 : index
      %c0_66 = arith.constant 0 : index
      %198 = vector.load %arg2[%c0_64, %c0_65, %c0_66] : memref<2x8x32xf32, #tpu.memory_space<vmem>>, vector<2x8x32xf32>
      %c0_67 = arith.constant 0 : index
      %c0_68 = arith.constant 0 : index
      %c0_69 = arith.constant 0 : index
      %199 = vector.load %arg12[%c0_67, %c0_68, %c0_69] : memref<2x8x32xf32, #tpu.memory_space<vmem>>, vector<2x8x32xf32>
      tpu.vector_store %arg12[%c0_67, %c0_68, %c0_69], %198 {strides = array<i32>} : memref<2x8x32xf32, #tpu.memory_space<vmem>>, vector<2x8x32xf32>,
    } else {
    }
    %c0 = arith.constant 0 : index
    %c0_1 = arith.constant 0 : index
    %c0_2 = arith.constant 0 : index
    %3 = vector.load %arg12[%c0, %c0_1, %c0_2] : memref<2x8x32xf32, #tpu.memory_space<vmem>>, vector<2x8x32xf32>
    %4 = vector.shape_cast %3 : vector<2x8x32xf32> to vector<16x32xf32>
    %c0_3 = arith.constant 0 : index
    %c0_4 = arith.constant 0 : index
    %c0_5 = arith.constant 0 : index
    %5 = vector.load %arg4[%c0_3, %c0_4, %c0_5] : memref<1x32x96xbf16, #tpu.memory_space<vmem>>, vector<1x32x96xbf16>
    %6 = vector.shape_cast %5 : vector<1x32x96xbf16> to vector<32x96xbf16>
    %c0_6 = arith.constant 0 : index
    %c0_7 = arith.constant 0 : index
    %c0_8 = arith.constant 0 : index
    %7 = vector.load %arg5[%c0_6, %c0_7, %c0_8] : memref<1x1x96xf32, #tpu.memory_space<vmem>>, vector<1x1x96xf32>
    %8 = vector.shape_cast %7 : vector<1x1x96xf32> to vector<1x96xf32>
    %c0_9 = arith.constant 0 : index
    %c0_10 = arith.constant 0 : index
    %c0_11 = arith.constant 0 : index
    %9 = vector.load %arg6[%c0_9, %c0_10, %c0_11] : memref<1x32x32xbf16, #tpu.memory_space<vmem>>, vector<1x32x32xbf16>
    %10 = vector.shape_cast %9 : vector<1x32x32xbf16> to vector<32x32xbf16>
    %c0_12 = arith.constant 0 : index
    %c0_13 = arith.constant 0 : index
    %c0_14 = arith.constant 0 : index
    %11 = vector.load %arg7[%c0_12, %c0_13, %c0_14] : memref<1x6x32xf32, #tpu.memory_space<vmem>>, vector<1x6x32xf32>
    %12 = vector.shape_cast %11 : vector<1x6x32xf32> to vector<6x32xf32>
    %13 = vector.extract_strided_slice %12 {offsets = [0, 0], sizes = [1, 32], strides = [1, 1]} : vector<6x32xf32> to vector<1x32xf32>
    %14 = vector.extract_strided_slice %12 {offsets = [1, 0], sizes = [1, 32], strides = [1, 1]} : vector<6x32xf32> to vector<1x32xf32>
    %15 = vector.extract_strided_slice %12 {offsets = [2, 0], sizes = [1, 32], strides = [1, 1]} : vector<6x32xf32> to vector<1x32xf32>
    %16 = vector.extract_strided_slice %12 {offsets = [3, 0], sizes = [1, 32], strides = [1, 1]} : vector<6x32xf32> to vector<1x32xf32>
    %17 = vector.extract_strided_slice %12 {offsets = [4, 0], sizes = [1, 32], strides = [1, 1]} : vector<6x32xf32> to vector<1x32xf32>
    %18 = vector.extract_strided_slice %12 {offsets = [5, 0], sizes = [1, 32], strides = [1, 1]} : vector<6x32xf32> to vector<1x32xf32>
    %c0_15 = arith.constant 0 : index
    %c0_16 = arith.constant 0 : index
    %c0_17 = arith.constant 0 : index
    %19 = vector.load %arg8[%c0_15, %c0_16, %c0_17] : memref<1x32x64xbf16, #tpu.memory_space<vmem>>, vector<1x32x64xbf16>
    %20 = vector.shape_cast %19 : vector<1x32x64xbf16> to vector<32x64xbf16>
    %c0_18 = arith.constant 0 : index
    %c0_19 = arith.constant 0 : index
    %c0_20 = arith.constant 0 : index
    %21 = vector.load %arg9[%c0_18, %c0_19, %c0_20] : memref<1x1x64xf32, #tpu.memory_space<vmem>>, vector<1x1x64xf32>
    %22 = vector.shape_cast %21 : vector<1x1x64xf32> to vector<1x64xf32>
    %c0_21 = arith.constant 0 : index
    %c0_22 = arith.constant 0 : index
    %c0_23 = arith.constant 0 : index
    %23 = vector.load %arg10[%c0_21, %c0_22, %c0_23] : memref<1x64x32xbf16, #tpu.memory_space<vmem>>, vector<1x64x32xbf16>
    %24 = vector.shape_cast %23 : vector<1x64x32xbf16> to vector<64x32xbf16>
    %25 = arith.truncf %4 : vector<16x32xf32> to vector<16x32xbf16>
    %cst = arith.constant dense<0.000000e+00> : vector<16x96xf32>
    %26 = tpu.matmul %25, %6, %cst {dimension_numbers = #tpu.dot_dimension_numbers<[1], [0], [0], [1], [0, 0, 1, 1], [], []>} : vector<16x32xbf16>, vector<32x96xbf16>, vector<16x96xf32> -> vector<16x96xf32>
    %27 = vector.broadcast %8 : vector<1x96xf32> to vector<16x96xf32>
    %28 = arith.addf %26, %27 : vector<16x96xf32>
    %29 = vector.shape_cast %28 : vector<16x96xf32> to vector<2x8x96xf32>
    %30 = tpu.iota {dimensions = array<i32: 0>} : vector<8x8xi32>
    %31 = tpu.iota {dimensions = array<i32: 1>} : vector<8x8xi32>
    %c2_i32 = arith.constant 2 : i32
    %32 = vector.broadcast %c2_i32 : i32 to vector<8x8xi32>
    %33 = arith.cmpi slt, %30, %32 : vector<8x8xi32>
    %c2_i32_24 = arith.constant 2 : i32
    %34 = vector.broadcast %c2_i32_24 : i32 to vector<8x8xi32>
    %35 = arith.cmpi sge, %31, %34 : vector<8x8xi32>
    %36 = arith.andi %33, %35 : vector<8x8xi1>
    %cst_25 = arith.constant -1.000000e+30 : f32
    %cst_26 = arith.constant 0.000000e+00 : f32
    %37 = vector.broadcast %cst_25 : f32 to vector<8x8xf32>
    %38 = vector.broadcast %cst_26 : f32 to vector<8x8xf32>
    %39 = arith.select %36, %37, %38 : vector<8x8xi1>, vector<8x8xf32>
    %40 = vector.shape_cast %39 : vector<8x8xf32> to vector<1x8x8xf32>
    %c0_27 = arith.constant 0 : index
    %c0_28 = arith.constant 0 : index
    %c0_29 = arith.constant 0 : index
    %41 = vector.load %arg3[%c0_27, %c0_28, %c0_29] : memref<2x1x8xf32, #tpu.memory_space<vmem>>, vector<2x1x8xf32>
    %42 = vector.broadcast %40 : vector<1x8x8xf32> to vector<2x8x8xf32>
    %43 = vector.broadcast %41 : vector<2x1x8xf32> to vector<2x8x8xf32>
    %44 = arith.addf %42, %43 : vector<2x8x8xf32>
    %45 = vector.extract_strided_slice %29 {offsets = [0, 0, 0], sizes = [2, 8, 8], strides = [1, 1, 1]} : vector<2x8x96xf32> to vector<2x8x8xf32>
    %46 = vector.extract_strided_slice %29 {offsets = [0, 0, 32], sizes = [2, 8, 8], strides = [1, 1, 1]} : vector<2x8x96xf32> to vector<2x8x8xf32>
    %47 = vector.extract_strided_slice %29 {offsets = [0, 0, 64], sizes = [2, 8, 8], strides = [1, 1, 1]} : vector<2x8x96xf32> to vector<2x8x8xf32>
    %48 = arith.truncf %45 : vector<2x8x8xf32> to vector<2x8x8xbf16>
    %49 = arith.truncf %46 : vector<2x8x8xf32> to vector<2x8x8xbf16>
    "tpu.trace_start"() <{level = 10 : i32, message = "bqd,bkd->bqk"}> : () -> ()
    %cst_30 = arith.constant dense<0.000000e+00> : vector<2x8x8xf32>
    %50 = tpu.matmul %48, %49, %cst_30 {dimension_numbers = #tpu.dot_dimension_numbers<[2], [2], [1], [1], [0, 0, 0, 1, 1, 1], [0], [0]>} : vector<2x8x8xbf16>, vector<2x8x8xbf16>, vector<2x8x8xf32> -> vector<2x8x8xf32>
    "tpu.trace_stop"() : () -> ()
    %51 = arith.addf %50, %44 : vector<2x8x8xf32>
    %cst_31 = arith.constant dense<0xFF800000> : vector<2x8xf32>
    %52 = vector.multi_reduction <maximumf>, %51, %cst_31 [2] : vector<2x8x8xf32> to vector<2x8xf32>
    %53 = vector.shape_cast %52 : vector<2x8xf32> to vector<2x8x1xf32>
    %54 = vector.broadcast %53 : vector<2x8x1xf32> to vector<2x8x8xf32>
    %55 = arith.subf %51, %54 : vector<2x8x8xf32>
    %56 = math.exp %55 : vector<2x8x8xf32>
    %cst_32 = arith.constant dense<0.000000e+00> : vector<2x8xf32>
    %57 = vector.multi_reduction <add>, %56, %cst_32 [2] : vector<2x8x8xf32> to vector<2x8xf32>
    %58 = vector.shape_cast %57 : vector<2x8xf32> to vector<2x8x1xf32>
    %59 = tpu.reciprocal %58 {approx = true} : vector<2x8x1xf32> -> vector<2x8x1xf32>
    %60 = vector.broadcast %59 : vector<2x8x1xf32> to vector<2x8x8xf32>
    %61 = arith.mulf %56, %60 : vector<2x8x8xf32>
    %62 = arith.truncf %61 : vector<2x8x8xf32> to vector<2x8x8xbf16>
    %63 = arith.truncf %47 : vector<2x8x8xf32> to vector<2x8x8xbf16>
    "tpu.trace_start"() <{level = 10 : i32, message = "bqk,bkd->bqd"}> : () -> ()
    %cst_33 = arith.constant dense<0.000000e+00> : vector<2x8x8xf32>
    %64 = tpu.matmul %62, %63, %cst_33 {dimension_numbers = #tpu.dot_dimension_numbers<[2], [1], [1], [2], [0, 0, 0, 1, 1, 2], [0], [0]>} : vector<2x8x8xbf16>, vector<2x8x8xbf16>, vector<2x8x8xf32> -> vector<2x8x8xf32>
    "tpu.trace_stop"() : () -> ()
    %65 = vector.extract_strided_slice %29 {offsets = [0, 0, 8], sizes = [2, 8, 8], strides = [1, 1, 1]} : vector<2x8x96xf32> to vector<2x8x8xf32>
    %66 = vector.extract_strided_slice %29 {offsets = [0, 0, 40], sizes = [2, 8, 8], strides = [1, 1, 1]} : vector<2x8x96xf32> to vector<2x8x8xf32>
    %67 = vector.extract_strided_slice %29 {offsets = [0, 0, 72], sizes = [2, 8, 8], strides = [1, 1, 1]} : vector<2x8x96xf32> to vector<2x8x8xf32>
    %68 = arith.truncf %65 : vector<2x8x8xf32> to vector<2x8x8xbf16>
    %69 = arith.truncf %66 : vector<2x8x8xf32> to vector<2x8x8xbf16>
    "tpu.trace_start"() <{level = 10 : i32, message = "bqd,bkd->bqk"}> : () -> ()
    %cst_34 = arith.constant dense<0.000000e+00> : vector<2x8x8xf32>
    %70 = tpu.matmul %68, %69, %cst_34 {dimension_numbers = #tpu.dot_dimension_numbers<[2], [2], [1], [1], [0, 0, 0, 1, 1, 1], [0], [0]>} : vector<2x8x8xbf16>, vector<2x8x8xbf16>, vector<2x8x8xf32> -> vector<2x8x8xf32>
    "tpu.trace_stop"() : () -> ()
    %71 = arith.addf %70, %44 : vector<2x8x8xf32>
    %cst_35 = arith.constant dense<0xFF800000> : vector<2x8xf32>
    %72 = vector.multi_reduction <maximumf>, %71, %cst_35 [2] : vector<2x8x8xf32> to vector<2x8xf32>
    %73 = vector.shape_cast %72 : vector<2x8xf32> to vector<2x8x1xf32>
    %74 = vector.broadcast %73 : vector<2x8x1xf32> to vector<2x8x8xf32>
    %75 = arith.subf %71, %74 : vector<2x8x8xf32>
    %76 = math.exp %75 : vector<2x8x8xf32>
    %cst_36 = arith.constant dense<0.000000e+00> : vector<2x8xf32>
    %77 = vector.multi_reduction <add>, %76, %cst_36 [2] : vector<2x8x8xf32> to vector<2x8xf32>
    %78 = vector.shape_cast %77 : vector<2x8xf32> to vector<2x8x1xf32>
    %79 = tpu.reciprocal %78 {approx = true} : vector<2x8x1xf32> -> vector<2x8x1xf32>
    %80 = vector.broadcast %79 : vector<2x8x1xf32> to vector<2x8x8xf32>
    %81 = arith.mulf %76, %80 : vector<2x8x8xf32>
    %82 = arith.truncf %81 : vector<2x8x8xf32> to vector<2x8x8xbf16>
    %83 = arith.truncf %67 : vector<2x8x8xf32> to vector<2x8x8xbf16>
    "tpu.trace_start"() <{level = 10 : i32, message = "bqk,bkd->bqd"}> : () -> ()
    %cst_37 = arith.constant dense<0.000000e+00> : vector<2x8x8xf32>
    %84 = tpu.matmul %82, %83, %cst_37 {dimension_numbers = #tpu.dot_dimension_numbers<[2], [1], [1], [2], [0, 0, 0, 1, 1, 2], [0], [0]>} : vector<2x8x8xbf16>, vector<2x8x8xbf16>, vector<2x8x8xf32> -> vector<2x8x8xf32>
    "tpu.trace_stop"() : () -> ()
    %85 = vector.extract_strided_slice %29 {offsets = [0, 0, 16], sizes = [2, 8, 8], strides = [1, 1, 1]} : vector<2x8x96xf32> to vector<2x8x8xf32>
    %86 = vector.extract_strided_slice %29 {offsets = [0, 0, 48], sizes = [2, 8, 8], strides = [1, 1, 1]} : vector<2x8x96xf32> to vector<2x8x8xf32>
    %87 = vector.extract_strided_slice %29 {offsets = [0, 0, 80], sizes = [2, 8, 8], strides = [1, 1, 1]} : vector<2x8x96xf32> to vector<2x8x8xf32>
    %88 = arith.truncf %85 : vector<2x8x8xf32> to vector<2x8x8xbf16>
    %89 = arith.truncf %86 : vector<2x8x8xf32> to vector<2x8x8xbf16>
    "tpu.trace_start"() <{level = 10 : i32, message = "bqd,bkd->bqk"}> : () -> ()
    %cst_38 = arith.constant dense<0.000000e+00> : vector<2x8x8xf32>
    %90 = tpu.matmul %88, %89, %cst_38 {dimension_numbers = #tpu.dot_dimension_numbers<[2], [2], [1], [1], [0, 0, 0, 1, 1, 1], [0], [0]>} : vector<2x8x8xbf16>, vector<2x8x8xbf16>, vector<2x8x8xf32> -> vector<2x8x8xf32>
    "tpu.trace_stop"() : () -> ()
    %91 = arith.addf %90, %44 : vector<2x8x8xf32>
    %cst_39 = arith.constant dense<0xFF800000> : vector<2x8xf32>
    %92 = vector.multi_reduction <maximumf>, %91, %cst_39 [2] : vector<2x8x8xf32> to vector<2x8xf32>
    %93 = vector.shape_cast %92 : vector<2x8xf32> to vector<2x8x1xf32>
    %94 = vector.broadcast %93 : vector<2x8x1xf32> to vector<2x8x8xf32>
    %95 = arith.subf %91, %94 : vector<2x8x8xf32>
    %96 = math.exp %95 : vector<2x8x8xf32>
    %cst_40 = arith.constant dense<0.000000e+00> : vector<2x8xf32>
    %97 = vector.multi_reduction <add>, %96, %cst_40 [2] : vector<2x8x8xf32> to vector<2x8xf32>
    %98 = vector.shape_cast %97 : vector<2x8xf32> to vector<2x8x1xf32>
    %99 = tpu.reciprocal %98 {approx = true} : vector<2x8x1xf32> -> vector<2x8x1xf32>
    %100 = vector.broadcast %99 : vector<2x8x1xf32> to vector<2x8x8xf32>
    %101 = arith.mulf %96, %100 : vector<2x8x8xf32>
    %102 = arith.truncf %101 : vector<2x8x8xf32> to vector<2x8x8xbf16>
    %103 = arith.truncf %87 : vector<2x8x8xf32> to vector<2x8x8xbf16>
    "tpu.trace_start"() <{level = 10 : i32, message = "bqk,bkd->bqd"}> : () -> ()
    %cst_41 = arith.constant dense<0.000000e+00> : vector<2x8x8xf32>
    %104 = tpu.matmul %102, %103, %cst_41 {dimension_numbers = #tpu.dot_dimension_numbers<[2], [1], [1], [2], [0, 0, 0, 1, 1, 2], [0], [0]>} : vector<2x8x8xbf16>, vector<2x8x8xbf16>, vector<2x8x8xf32> -> vector<2x8x8xf32>
    "tpu.trace_stop"() : () -> ()
    %105 = vector.extract_strided_slice %29 {offsets = [0, 0, 24], sizes = [2, 8, 8], strides = [1, 1, 1]} : vector<2x8x96xf32> to vector<2x8x8xf32>
    %106 = vector.extract_strided_slice %29 {offsets = [0, 0, 56], sizes = [2, 8, 8], strides = [1, 1, 1]} : vector<2x8x96xf32> to vector<2x8x8xf32>
    %107 = vector.extract_strided_slice %29 {offsets = [0, 0, 88], sizes = [2, 8, 8], strides = [1, 1, 1]} : vector<2x8x96xf32> to vector<2x8x8xf32>
    %108 = arith.truncf %105 : vector<2x8x8xf32> to vector<2x8x8xbf16>
    %109 = arith.truncf %106 : vector<2x8x8xf32> to vector<2x8x8xbf16>
    "tpu.trace_start"() <{level = 10 : i32, message = "bqd,bkd->bqk"}> : () -> ()
    %cst_42 = arith.constant dense<0.000000e+00> : vector<2x8x8xf32>
    %110 = tpu.matmul %108, %109, %cst_42 {dimension_numbers = #tpu.dot_dimension_numbers<[2], [2], [1], [1], [0, 0, 0, 1, 1, 1], [0], [0]>} : vector<2x8x8xbf16>, vector<2x8x8xbf16>, vector<2x8x8xf32> -> vector<2x8x8xf32>
    "tpu.trace_stop"() : () -> ()
    %111 = arith.addf %110, %44 : vector<2x8x8xf32>
    %cst_43 = arith.constant dense<0xFF800000> : vector<2x8xf32>
    %112 = vector.multi_reduction <maximumf>, %111, %cst_43 [2] : vector<2x8x8xf32> to vector<2x8xf32>
    %113 = vector.shape_cast %112 : vector<2x8xf32> to vector<2x8x1xf32>
    %114 = vector.broadcast %113 : vector<2x8x1xf32> to vector<2x8x8xf32>
    %115 = arith.subf %111, %114 : vector<2x8x8xf32>
    %116 = math.exp %115 : vector<2x8x8xf32>
    %cst_44 = arith.constant dense<0.000000e+00> : vector<2x8xf32>
    %117 = vector.multi_reduction <add>, %116, %cst_44 [2] : vector<2x8x8xf32> to vector<2x8xf32>
    %118 = vector.shape_cast %117 : vector<2x8xf32> to vector<2x8x1xf32>
    %119 = tpu.reciprocal %118 {approx = true} : vector<2x8x1xf32> -> vector<2x8x1xf32>
    %120 = vector.broadcast %119 : vector<2x8x1xf32> to vector<2x8x8xf32>
    %121 = arith.mulf %116, %120 : vector<2x8x8xf32>
    %122 = arith.truncf %121 : vector<2x8x8xf32> to vector<2x8x8xbf16>
    %123 = arith.truncf %107 : vector<2x8x8xf32> to vector<2x8x8xbf16>
    "tpu.trace_start"() <{level = 10 : i32, message = "bqk,bkd->bqd"}> : () -> ()
    %cst_45 = arith.constant dense<0.000000e+00> : vector<2x8x8xf32>
    %124 = tpu.matmul %122, %123, %cst_45 {dimension_numbers = #tpu.dot_dimension_numbers<[2], [1], [1], [2], [0, 0, 0, 1, 1, 2], [0], [0]>} : vector<2x8x8xbf16>, vector<2x8x8xbf16>, vector<2x8x8xf32> -> vector<2x8x8xf32>
    "tpu.trace_stop"() : () -> ()
    %125 = tpu.concatenate %64, %84, %104, %124 in 2 : vector<2x8x8xf32>, vector<2x8x8xf32>, vector<2x8x8xf32>, vector<2x8x8xf32> -> vector<2x8x32xf32>
    %126 = vector.shape_cast %125 : vector<2x8x32xf32> to vector<16x32xf32>
    %127 = arith.truncf %126 : vector<16x32xf32> to vector<16x32xbf16>
    %cst_46 = arith.constant dense<0.000000e+00> : vector<16x32xf32>
    %128 = tpu.matmul %127, %10, %cst_46 {dimension_numbers = #tpu.dot_dimension_numbers<[1], [0], [0], [1], [0, 0, 1, 1], [], []>} : vector<16x32xbf16>, vector<32x32xbf16>, vector<16x32xf32> -> vector<16x32xf32>
    %129 = vector.broadcast %13 : vector<1x32xf32> to vector<16x32xf32>
    %130 = arith.addf %128, %129 : vector<16x32xf32>
    %131 = vector.shape_cast %130 : vector<16x32xf32> to vector<2x8x32xf32>
    %132 = arith.addf %3, %131 : vector<2x8x32xf32>
    %cst_47 = arith.constant dense<0.000000e+00> : vector<2x8xf32>
    %133 = vector.multi_reduction <add>, %132, %cst_47 [2] : vector<2x8x32xf32> to vector<2x8xf32>
    %134 = vector.shape_cast %133 : vector<2x8xf32> to vector<2x8x1xf32>
    %cst_48 = arith.constant 3.200000e+01 : f32
    %135 = vector.broadcast %cst_48 : f32 to vector<2x8x1xf32>
    %136 = arith.divf %134, %135 : vector<2x8x1xf32>
    %137 = vector.broadcast %136 : vector<2x8x1xf32> to vector<2x8x32xf32>
    %138 = arith.subf %132, %137 : vector<2x8x32xf32>
    %139 = arith.mulf %138, %138 : vector<2x8x32xf32>
    %cst_49 = arith.constant dense<0.000000e+00> : vector<2x8xf32>
    %140 = vector.multi_reduction <add>, %139, %cst_49 [2] : vector<2x8x32xf32> to vector<2x8xf32>
    %141 = vector.shape_cast %140 : vector<2x8xf32> to vector<2x8x1xf32>
    %cst_50 = arith.constant 3.200000e+01 : f32
    %142 = vector.broadcast %cst_50 : f32 to vector<2x8x1xf32>
    %143 = arith.divf %141, %142 : vector<2x8x1xf32>
    %144 = vector.broadcast %136 : vector<2x8x1xf32> to vector<2x8x32xf32>
    %145 = arith.subf %132, %144 : vector<2x8x32xf32>
    %cst_51 = arith.constant 9.99999974E-6 : f32
    %146 = vector.broadcast %cst_51 : f32 to vector<2x8x1xf32>
    %147 = arith.addf %143, %146 : vector<2x8x1xf32>
    %148 = math.rsqrt %147 : vector<2x8x1xf32>
    %149 = vector.broadcast %148 : vector<2x8x1xf32> to vector<2x8x32xf32>
    %150 = arith.mulf %145, %149 : vector<2x8x32xf32>
    %151 = vector.shape_cast %14 : vector<1x32xf32> to vector<1x1x32xf32>
    %152 = vector.broadcast %151 : vector<1x1x32xf32> to vector<2x8x32xf32>
    %153 = arith.mulf %150, %152 : vector<2x8x32xf32>
    %154 = vector.shape_cast %15 : vector<1x32xf32> to vector<1x1x32xf32>
    %155 = vector.broadcast %154 : vector<1x1x32xf32> to vector<2x8x32xf32>
    %156 = arith.addf %153, %155 : vector<2x8x32xf32>
    %157 = vector.shape_cast %156 : vector<2x8x32xf32> to vector<16x32xf32>
    %158 = arith.truncf %157 : vector<16x32xf32> to vector<16x32xbf16>
    %cst_52 = arith.constant dense<0.000000e+00> : vector<16x64xf32>
    %159 = tpu.matmul %158, %20, %cst_52 {dimension_numbers = #tpu.dot_dimension_numbers<[1], [0], [0], [1], [0, 0, 1, 1], [], []>} : vector<16x32xbf16>, vector<32x64xbf16>, vector<16x64xf32> -> vector<16x64xf32>
    %160 = vector.broadcast %22 : vector<1x64xf32> to vector<16x64xf32>
    %161 = arith.addf %159, %160 : vector<16x64xf32>
    %cst_53 = arith.constant 0.000000e+00 : f32
    %162 = vector.broadcast %cst_53 : f32 to vector<16x64xf32>
    %163 = arith.maximumf %161, %162 : vector<16x64xf32>
    %164 = arith.truncf %163 : vector<16x64xf32> to vector<16x64xbf16>
    %cst_54 = arith.constant dense<0.000000e+00> : vector<16x32xf32>
    %165 = tpu.matmul %164, %24, %cst_54 {dimension_numbers = #tpu.dot_dimension_numbers<[1], [0], [0], [1], [0, 0, 1, 1], [], []>} : vector<16x64xbf16>, vector<64x32xbf16>, vector<16x32xf32> -> vector<16x32xf32>
    %166 = vector.broadcast %18 : vector<1x32xf32> to vector<16x32xf32>
    %167 = arith.addf %165, %166 : vector<16x32xf32>
    %168 = vector.shape_cast %167 : vector<16x32xf32> to vector<2x8x32xf32>
    %169 = arith.addf %156, %168 : vector<2x8x32xf32>
    %cst_55 = arith.constant dense<0.000000e+00> : vector<2x8xf32>
    %170 = vector.multi_reduction <add>, %169, %cst_55 [2] : vector<2x8x32xf32> to vector<2x8xf32>
    %171 = vector.shape_cast %170 : vector<2x8xf32> to vector<2x8x1xf32>
    %cst_56 = arith.constant 3.200000e+01 : f32
    %172 = vector.broadcast %cst_56 : f32 to vector<2x8x1xf32>
    %173 = arith.divf %171, %172 : vector<2x8x1xf32>
    %174 = vector.broadcast %173 : vector<2x8x1xf32> to vector<2x8x32xf32>
    %175 = arith.subf %169, %174 : vector<2x8x32xf32>
    %176 = arith.mulf %175, %175 : vector<2x8x32xf32>
    %cst_57 = arith.constant dense<0.000000e+00> : vector<2x8xf32>
    %177 = vector.multi_reduction <add>, %176, %cst_57 [2] : vector<2x8x32xf32> to vector<2x8xf32>
    %178 = vector.shape_cast %177 : vector<2x8xf32> to vector<2x8x1xf32>
    %cst_58 = arith.constant 3.200000e+01 : f32
    %179 = vector.broadcast %cst_58 : f32 to vector<2x8x1xf32>
    %180 = arith.divf %178, %179 : vector<2x8x1xf32>
    %181 = vector.broadcast %173 : vector<2x8x1xf32> to vector<2x8x32xf32>
    %182 = arith.subf %169, %181 : vector<2x8x32xf32>
    %cst_59 = arith.constant 9.99999974E-6 : f32
    %183 = vector.broadcast %cst_59 : f32 to vector<2x8x1xf32>
    %184 = arith.addf %180, %183 : vector<2x8x1xf32>
    %185 = math.rsqrt %184 : vector<2x8x1xf32>
    %186 = vector.broadcast %185 : vector<2x8x1xf32> to vector<2x8x32xf32>
    %187 = arith.mulf %182, %186 : vector<2x8x32xf32>
    %188 = vector.shape_cast %16 : vector<1x32xf32> to vector<1x1x32xf32>
    %189 = vector.broadcast %188 : vector<1x1x32xf32> to vector<2x8x32xf32>
    %190 = arith.mulf %187, %189 : vector<2x8x32xf32>
    %191 = vector.shape_cast %17 : vector<1x32xf32> to vector<1x1x32xf32>
    %192 = vector.broadcast %191 : vector<1x1x32xf32> to vector<2x8x32xf32>
    %193 = arith.addf %190, %192 : vector<2x8x32xf32>
    %c0_60 = arith.constant 0 : index
    %c0_61 = arith.constant 0 : index
    %c0_62 = arith.constant 0 : index
    %194 = vector.load %arg12[%c0_60, %c0_61, %c0_62] : memref<2x8x32xf32, #tpu.memory_space<vmem>>, vector<2x8x32xf32>
    tpu.vector_store %arg12[%c0_60, %c0_61, %c0_62], %193 {strides = array<i32>} : memref<2x8x32xf32, #tpu.memory_space<vmem>>, vector<2x8x32xf32>,
    %c1_i32 = arith.constant 1 : i32
    %195 = arith.cmpi eq, %arg1, %c1_i32 : i32
    %196 = arith.extui %195 : i1 to i32
    %c0_i32_63 = arith.constant 0 : i32
    %197 = arith.cmpi ne, %196, %c0_i32_63 : i32
    scf.if %197 {
      %c0_64 = arith.constant 0 : index
      %c0_65 = arith.constant 0 : index
      %c0_66 = arith.constant 0 : index
      %198 = vector.load %arg11[%c0_64, %c0_65, %c0_66] : memref<2x8x32xf32, #tpu.memory_space<vmem>>, vector<2x8x32xf32>
      tpu.vector_store %arg11[%c0_64, %c0_65, %c0_66], %193 {strides = array<i32>} : memref<2x8x32xf32, #tpu.memory_space<vmem>>, vector<2x8x32xf32>,
    } else {
    }
    return
  }
  func.func @transform_0(%arg0: i32, %arg1: i32) -> (i32, i32, i32) {
    %c0_i32 = arith.constant 0 : i32
    %c0_i32_0 = arith.constant 0 : i32
    %c0_i32_1 = arith.constant 0 : i32
    return %arg0, %c0_i32, %c0_i32_0 : i32, i32, i32
  }
  func.func @transform_1(%arg0: i32, %arg1: i32) -> (i32, i32, i32) {
    %c0_i32 = arith.constant 0 : i32
    %c0_i32_0 = arith.constant 0 : i32
    %c0_i32_1 = arith.constant 0 : i32
    return %arg0, %c0_i32, %c0_i32_0 : i32, i32, i32
  }
  func.func @transform_2(%arg0: i32, %arg1: i32) -> (i32, i32, i32) {
    %c0_i32 = arith.constant 0 : i32
    %c0_i32_0 = arith.constant 0 : i32
    %c0_i32_1 = arith.constant 0 : i32
    return %arg1, %c0_i32, %c0_i32_0 : i32, i32, i32
  }
  func.func @transform_3(%arg0: i32, %arg1: i32) -> (i32, i32, i32) {
    %c0_i32 = arith.constant 0 : i32
    %c0_i32_0 = arith.constant 0 : i32
    %c0_i32_1 = arith.constant 0 : i32
    return %arg1, %c0_i32, %c0_i32_0 : i32, i32, i32
  }
  func.func @transform_4(%arg0: i32, %arg1: i32) -> (i32, i32, i32) {
    %c0_i32 = arith.constant 0 : i32
    %c0_i32_0 = arith.constant 0 : i32
    %c0_i32_1 = arith.constant 0 : i32
    return %arg1, %c0_i32, %c0_i32_0 : i32, i32, i32
  }
  func.func @transform_5(%arg0: i32, %arg1: i32) -> (i32, i32, i32) {
    %c0_i32 = arith.constant 0 : i32
    %c0_i32_0 = arith.constant 0 : i32
    %c0_i32_1 = arith.constant 0 : i32
    return %arg1, %c0_i32, %c0_i32_0 : i32, i32, i32
  }
  func.func @transform_6(%arg0: i32, %arg1: i32) -> (i32, i32, i32) {
    %c0_i32 = arith.constant 0 : i32
    %c0_i32_0 = arith.constant 0 : i32
    %c0_i32_1 = arith.constant 0 : i32
    return %arg1, %c0_i32, %c0_i32_0 : i32, i32, i32
  }
  func.func @transform_7(%arg0: i32, %arg1: i32) -> (i32, i32, i32) {
    %c0_i32 = arith.constant 0 : i32
    %c0_i32_0 = arith.constant 0 : i32
    %c0_i32_1 = arith.constant 0 : i32
    return %arg1, %c0_i32, %c0_i32_0 : i32, i32, i32
  }
  func.func @transform_8(%arg0: i32, %arg1: i32) -> (i32, i32, i32) {
    %c0_i32 = arith.constant 0 : i32
    %c0_i32_0 = arith.constant 0 : i32
    %c0_i32_1 = arith.constant 0 : i32
    return %arg1, %c0_i32, %c0_i32_0 : i32, i32, i32
  }
  func.func @transform_9(%arg0: i32, %arg1: i32) -> (i32, i32, i32) {
    %c0_i32 = arith.constant 0 : i32
    %c0_i32_0 = arith.constant 0 : i32
    %c0_i32_1 = arith.constant 0 : i32
    return %arg0, %c0_i32, %c0_i32_0 : i32, i32, i32
  }
}

</mosaic_0001>

<llo_original>
// kernel: cross_attention_transformer_forward.1
$region0: #{cross_attention_transformer_forward.1}
  #allocation0 [shape = 'u32[]', space=smem, size = 0x4, offset = 0x4, fixed_abs, tag = 'smem constant byte address 0x4 - core index']
  #allocation1 [shape = 'u32[144,128]{1,0:T(1,128)}', space=vmem, size = 0x12000, scoped, tag = 'internal scratch']
  #allocation2 [shape = 'f32[2,8,32]{2,1,0:T(8,128)}', space=vmem, size = 0x2000, scoped, tag = 'scratch operand']
  %s0 = inlined_call_operand.hbm [shape: f32[2,8,32], index: 0, kind: input, shape index: {}]
  %s1 = inlined_call_operand.hbm [shape: f32[2,1,8], index: 1, kind: input, shape index: {}]
  %s2 = inlined_call_operand.hbm [shape: bf16[2,32,96], index: 2, kind: input, shape index: {}]
  %s3 = inlined_call_operand.hbm [shape: f32[2,1,96], index: 3, kind: input, shape index: {}]
  %s4 = inlined_call_operand.hbm [shape: bf16[2,32,32], index: 4, kind: input, shape index: {}]
  %s5 = inlined_call_operand.hbm [shape: f32[2,6,32], index: 5, kind: input, shape index: {}]
  %s6 = inlined_call_operand.hbm [shape: bf16[2,32,64], index: 6, kind: input, shape index: {}]
  %s7 = inlined_call_operand.hbm [shape: f32[2,1,64], index: 7, kind: input, shape index: {}]
  %s8 = inlined_call_operand.hbm [shape: bf16[2,64,32], index: 8, kind: input, shape index: {}]
  %s9 = inlined_call_operand.hbm [shape: f32[2,8,32], index: 9, kind: output, shape index: {}]
  %s10 = sld [smem:[#allocation0]]
  $region113: #{cross_attention_transformer_forward.1} parent=0
    _
  %s12 = ssub.s32 1, %s10
  %s13 = scalar_select 0, %s12, %s10
  $region1: #{cross_attention_transformer_forward.1} parent=0
    #allocation3 [shape = 'u8[8192]{0}', space=vmem, size = 0x2000, scoped, tag = 'input window, operand 0, single buffered']
    #allocation4 [shape = 's32[2]{0}', space=sflag, size = 0x8, scoped, tag = 'scoped memory for cross_attention_transformer_forward.1']
    #allocation5 [shape = 's32[2]{0}', space=sflag, size = 0x8, scoped, tag = 'scoped memory for cross_attention_transformer_forward.1']
    #allocation6 [shape = 'u8[1024]{0}', space=vmem, size = 0x400, scoped, tag = 'input window, operand 1, single buffered']
    #allocation7 [shape = 's32[1]{0}', space=sflag, size = 0x4, scoped, tag = 'scoped memory for cross_attention_transformer_forward.1']
    #allocation8 [shape = 'u8[16384]{0}', space=vmem, size = 0x4000, scoped, tag = 'input window, operand 2']
    #allocation9 [shape = 'u8[1024]{0}', space=vmem, size = 0x400, scoped, tag = 'input window, operand 3']
    #allocation10 [shape = 'u8[16384]{0}', space=vmem, size = 0x4000, scoped, tag = 'input window, operand 4']
    #allocation11 [shape = 'u8[8192]{0}', space=vmem, size = 0x2000, scoped, tag = 'input window, operand 5']
    #allocation12 [shape = 'u8[16384]{0}', space=vmem, size = 0x4000, scoped, tag = 'input window, operand 6']
    #allocation13 [shape = 'u8[1024]{0}', space=vmem, size = 0x400, scoped, tag = 'input window, operand 7']
    #allocation14 [shape = 'u8[32768]{0}', space=vmem, size = 0x8000, scoped, tag = 'input window, operand 8']
    #allocation15 [shape = 'u8[8192]{0}', space=vmem, size = 0x2000, scoped, tag = 'output window, operand 0, single buffered']
    %14 = vsyncpa [#allocation4], 0
    %15 = vsyncpa [#allocation7], 0
    %16 = vsyncpa [#allocation5], 0
    loop: start=0, step=1, limit=4
    $region2: #{cross_attention_transformer_forward.1} parent=1 // loop_pre_header
      _
    $region3: #{cross_attention_transformer_forward.1} parent=1 // loop_header
      %s18 = sphi 0, %s22
      %p19 = scmp.ge.s32.totalorder %s18, 4
      %s25 = sphi 0, %s37
      %s26 = sphi 0, %s33
      %s27 = sphi 0, %s25
      %s28 = sphi 0, %s26
      %s29 = sphi 0, %s27
      %s30 = sphi 0, %s28
      %s40 = sphi 0, %s42
      %s43 = sphi 0, %s40
      %s44 = sphi 0, %s43
      %s60 = sphi 0, %s44
      %s66 = sphi 0, %s68
      %s69 = sphi 0, %s66
      %s70 = sphi 0, %s69
      %s86 = sphi 0, %s70
      %s92 = sphi 0, %s94
      %s95 = sphi 0, %s92
      %s96 = sphi 0, %s95
      %s112 = sphi 0, %s96
      %s118 = sphi 0, %s120
      %s121 = sphi 0, %s118
      %s122 = sphi 0, %s121
      %s138 = sphi 0, %s122
      %s144 = sphi 0, %s146
      %s147 = sphi 0, %s144
      %s148 = sphi 0, %s147
      %s164 = sphi 0, %s148
      %s170 = sphi 0, %s172
      %s173 = sphi 0, %s170
      %s174 = sphi 0, %s173
      %s190 = sphi 0, %s174
      %s196 = sphi 0, %s198
      %s199 = sphi 0, %s196
      %s200 = sphi 0, %s199
      %s216 = sphi 0, %s200
      %s222 = sphi 0, %s224
      %s225 = sphi 0, %s222
      %s226 = sphi 0, %s225
      %s242 = sphi 0, %s226
      %s248 = sphi 0, %s250
      %s251 = sphi 0, %s248
      %s252 = sphi 0, %s251
      %s268 = sphi 0, %s252
      %s274 = sphi 0, %s276
      %s277 = sphi 0, %s274
      %s278 = sphi 0, %s277
      %s294 = sphi 0, %s278
    $region4: #{cross_attention_transformer_forward.1} parent=1 // loop_header_branch
      %21 = sbr.rel (%p19) target = $region8
    $region5: #{cross_attention_transformer_forward.1} parent=1 // loop_body
      %s23 = ssub.s32 %s18, 1
      %s24 = ssub.s32 %s18, 2
      %s31 = sadd.s32 1, %s26
      %p32 = scmp.ge.s32.totalorder %s31, 2
      %s33 = scalar_select %p32, 0, %s31
      %s34 = sadd.s32 1, %s25
      %s35 = scalar_select %p32, %s34, %s25
      %p36 = scmp.ge.s32.totalorder %s35, 1
      %s37 = scalar_select %p36, 0, %s35
      %s38 = ssub.s32 %s25, %s37
      %p39 = scmp.eq.s32.totalorder %s38, 0
      %s41 = sadd.s32 %s40, 1
      %s42 = scalar_select %p39, %s40, %s41
      %p45 = pneg %p39
      %p46 = scmp.eq.s32.totalorder %s18, 1
      %p47 = por %p45, %p46
      %p48 = scmp.ne.s32.totalorder %s40, %s43
      %p49 = scmp.eq.s32.totalorder %s18, 0
      %p50 = por %p48, %p49
      %p51 = scmp.ne.s32.totalorder %s40, %s43
      %p52 = scmp.eq.s32.totalorder %s23, 1
      %p53 = por %p51, %p52
      %p54 = scmp.ne.s32.totalorder %s43, %s44
      %p55 = scmp.eq.s32.totalorder %s23, 0
      %p56 = por %p54, %p55
      %p57 = scmp.ne.s32.totalorder %s43, %s44
      %p58 = scmp.eq.s32.totalorder %s24, 1
      %p59 = por %p57, %p58
      %p61 = scmp.ne.s32.totalorder %s44, %s60
      %p62 = scmp.eq.s32.totalorder %s24, 0
      %p63 = por %p61, %p62
      %s64 = ssub.s32 %s25, %s37
      %p65 = scmp.eq.s32.totalorder %s64, 0
      %s67 = sadd.s32 %s66, 1
      %s68 = scalar_select %p65, %s66, %s67
      %p71 = pneg %p65
      %p72 = scmp.eq.s32.totalorder %s18, 1
      %p73 = por %p71, %p72
      %p74 = scmp.ne.s32.totalorder %s66, %s69
      %p75 = scmp.eq.s32.totalorder %s18, 0
      %p76 = por %p74, %p75
      %p77 = scmp.ne.s32.totalorder %s66, %s69
      %p78 = scmp.eq.s32.totalorder %s23, 1
      %p79 = por %p77, %p78
      %p80 = scmp.ne.s32.totalorder %s69, %s70
      %p81 = scmp.eq.s32.totalorder %s23, 0
      %p82 = por %p80, %p81
      %p83 = scmp.ne.s32.totalorder %s69, %s70
      %p84 = scmp.eq.s32.totalorder %s24, 1
      %p85 = por %p83, %p84
      %p87 = scmp.ne.s32.totalorder %s70, %s86
      %p88 = scmp.eq.s32.totalorder %s24, 0
      %p89 = por %p87, %p88
      %s90 = ssub.s32 %s26, %s33
      %p91 = scmp.eq.s32.totalorder %s90, 0
      %s93 = sadd.s32 %s92, 1
      %s94 = scalar_select %p91, %s92, %s93
      %p97 = pneg %p91
      %p98 = scmp.eq.s32.totalorder %s18, 1
      %p99 = por %p97, %p98
      %p100 = scmp.ne.s32.totalorder %s92, %s95
      %p101 = scmp.eq.s32.totalorder %s18, 0
      %p102 = por %p100, %p101
      %p103 = scmp.ne.s32.totalorder %s92, %s95
      %p104 = scmp.eq.s32.totalorder %s23, 1
      %p105 = por %p103, %p104
      %p106 = scmp.ne.s32.totalorder %s95, %s96
      %p107 = scmp.eq.s32.totalorder %s23, 0
      %p108 = por %p106, %p107
      %p109 = scmp.ne.s32.totalorder %s95, %s96
      %p110 = scmp.eq.s32.totalorder %s24, 1
      %p111 = por %p109, %p110
      %p113 = scmp.ne.s32.totalorder %s96, %s112
      %p114 = scmp.eq.s32.totalorder %s24, 0
      %p115 = por %p113, %p114
      %s116 = ssub.s32 %s26, %s33
      %p117 = scmp.eq.s32.totalorder %s116, 0
      %s119 = sadd.s32 %s118, 1
      %s120 = scalar_select %p117, %s118, %s119
      %p123 = pneg %p117
      %p124 = scmp.eq.s32.totalorder %s18, 1
      %p125 = por %p123, %p124
      %p126 = scmp.ne.s32.totalorder %s118, %s121
      %p127 = scmp.eq.s32.totalorder %s18, 0
      %p128 = por %p126, %p127
      %p129 = scmp.ne.s32.totalorder %s118, %s121
      %p130 = scmp.eq.s32.totalorder %s23, 1
      %p131 = por %p129, %p130
      %p132 = scmp.ne.s32.totalorder %s121, %s122
      %p133 = scmp.eq.s32.totalorder %s23, 0
      %p134 = por %p132, %p133
      %p135 = scmp.ne.s32.totalorder %s121, %s122
      %p136 = scmp.eq.s32.totalorder %s24, 1
      %p137 = por %p135, %p136
      %p139 = scmp.ne.s32.totalorder %s122, %s138
      %p140 = scmp.eq.s32.totalorder %s24, 0
      %p141 = por %p139, %p140
      %s142 = ssub.s32 %s26, %s33
      %p143 = scmp.eq.s32.totalorder %s142, 0
      %s145 = sadd.s32 %s144, 1
      %s146 = scalar_select %p143, %s144, %s145
      %p149 = pneg %p143
      %p150 = scmp.eq.s32.totalorder %s18, 1
      %p151 = por %p149, %p150
      %p152 = scmp.ne.s32.totalorder %s144, %s147
      %p153 = scmp.eq.s32.totalorder %s18, 0
      %p154 = por %p152, %p153
      %p155 = scmp.ne.s32.totalorder %s144, %s147
      %p156 = scmp.eq.s32.totalorder %s23, 1
      %p157 = por %p155, %p156
      %p158 = scmp.ne.s32.totalorder %s147, %s148
      %p159 = scmp.eq.s32.totalorder %s23, 0
      %p160 = por %p158, %p159
      %p161 = scmp.ne.s32.totalorder %s147, %s148
      %p162 = scmp.eq.s32.totalorder %s24, 1
      %p163 = por %p161, %p162
      %p165 = scmp.ne.s32.totalorder %s148, %s164
      %p166 = scmp.eq.s32.totalorder %s24, 0
      %p167 = por %p165, %p166
      %s168 = ssub.s32 %s26, %s33
      %p169 = scmp.eq.s32.totalorder %s168, 0
      %s171 = sadd.s32 %s170, 1
      %s172 = scalar_select %p169, %s170, %s171
      %p175 = pneg %p169
      %p176 = scmp.eq.s32.totalorder %s18, 1
      %p177 = por %p175, %p176
      %p178 = scmp.ne.s32.totalorder %s170, %s173
      %p179 = scmp.eq.s32.totalorder %s18, 0
      %p180 = por %p178, %p179
      %p181 = scmp.ne.s32.totalorder %s170, %s173
      %p182 = scmp.eq.s32.totalorder %s23, 1
      %p183 = por %p181, %p182
      %p184 = scmp.ne.s32.totalorder %s173, %s174
      %p185 = scmp.eq.s32.totalorder %s23, 0
      %p186 = por %p184, %p185
      %p187 = scmp.ne.s32.totalorder %s173, %s174
      %p188 = scmp.eq.s32.totalorder %s24, 1
      %p189 = por %p187, %p188
      %p191 = scmp.ne.s32.totalorder %s174, %s190
      %p192 = scmp.eq.s32.totalorder %s24, 0
      %p193 = por %p191, %p192
      %s194 = ssub.s32 %s26, %s33
      %p195 = scmp.eq.s32.totalorder %s194, 0
      %s197 = sadd.s32 %s196, 1
      %s198 = scalar_select %p195, %s196, %s197
      %p201 = pneg %p195
      %p202 = scmp.eq.s32.totalorder %s18, 1
      %p203 = por %p201, %p202
      %p204 = scmp.ne.s32.totalorder %s196, %s199
      %p205 = scmp.eq.s32.totalorder %s18, 0
      %p206 = por %p204, %p205
      %p207 = scmp.ne.s32.totalorder %s196, %s199
      %p208 = scmp.eq.s32.totalorder %s23, 1
      %p209 = por %p207, %p208
      %p210 = scmp.ne.s32.totalorder %s199, %s200
      %p211 = scmp.eq.s32.totalorder %s23, 0
      %p212 = por %p210, %p211
      %p213 = scmp.ne.s32.totalorder %s199, %s200
      %p214 = scmp.eq.s32.totalorder %s24, 1
      %p215 = por %p213, %p214
      %p217 = scmp.ne.s32.totalorder %s200, %s216
      %p218 = scmp.eq.s32.totalorder %s24, 0
      %p219 = por %p217, %p218
      %s220 = ssub.s32 %s26, %s33
      %p221 = scmp.eq.s32.totalorder %s220, 0
      %s223 = sadd.s32 %s222, 1
      %s224 = scalar_select %p221, %s222, %s223
      %p227 = pneg %p221
      %p228 = scmp.eq.s32.totalorder %s18, 1
      %p229 = por %p227, %p228
      %p230 = scmp.ne.s32.totalorder %s222, %s225
      %p231 = scmp.eq.s32.totalorder %s18, 0
      %p232 = por %p230, %p231
      %p233 = scmp.ne.s32.totalorder %s222, %s225
      %p234 = scmp.eq.s32.totalorder %s23, 1
      %p235 = por %p233, %p234
      %p236 = scmp.ne.s32.totalorder %s225, %s226
      %p237 = scmp.eq.s32.totalorder %s23, 0
      %p238 = por %p236, %p237
      %p239 = scmp.ne.s32.totalorder %s225, %s226
      %p240 = scmp.eq.s32.totalorder %s24, 1
      %p241 = por %p239, %p240
      %p243 = scmp.ne.s32.totalorder %s226, %s242
      %p244 = scmp.eq.s32.totalorder %s24, 0
      %p245 = por %p243, %p244
      %s246 = ssub.s32 %s26, %s33
      %p247 = scmp.eq.s32.totalorder %s246, 0
      %s249 = sadd.s32 %s248, 1
      %s250 = scalar_select %p247, %s248, %s249
      %p253 = pneg %p247
      %p254 = scmp.eq.s32.totalorder %s18, 1
      %p255 = por %p253, %p254
      %p256 = scmp.ne.s32.totalorder %s248, %s251
      %p257 = scmp.eq.s32.totalorder %s18, 0
      %p258 = por %p256, %p257
      %p259 = scmp.ne.s32.totalorder %s248, %s251
      %p260 = scmp.eq.s32.totalorder %s23, 1
      %p261 = por %p259, %p260
      %p262 = scmp.ne.s32.totalorder %s251, %s252
      %p263 = scmp.eq.s32.totalorder %s23, 0
      %p264 = por %p262, %p263
      %p265 = scmp.ne.s32.totalorder %s251, %s252
      %p266 = scmp.eq.s32.totalorder %s24, 1
      %p267 = por %p265, %p266
      %p269 = scmp.ne.s32.totalorder %s252, %s268
      %p270 = scmp.eq.s32.totalorder %s24, 0
      %p271 = por %p269, %p270
      %s272 = ssub.s32 %s25, %s37
      %p273 = scmp.eq.s32.totalorder %s272, 0
      %s275 = sadd.s32 %s274, 1
      %s276 = scalar_select %p273, %s274, %s275
      %p279 = pneg %p273
      %p280 = scmp.eq.s32.totalorder %s18, 1
      %p281 = por %p279, %p280
      %p282 = scmp.ne.s32.totalorder %s274, %s277
      %p283 = scmp.eq.s32.totalorder %s18, 0
      %p284 = por %p282, %p283
      %p285 = scmp.ne.s32.totalorder %s274, %s277
      %p286 = scmp.eq.s32.totalorder %s23, 1
      %p287 = por %p285, %p286
      %p288 = scmp.ne.s32.totalorder %s277, %s278
      %p289 = scmp.eq.s32.totalorder %s23, 0
      %p290 = por %p288, %p289
      %p291 = scmp.ne.s32.totalorder %s277, %s278
      %p292 = scmp.eq.s32.totalorder %s24, 1
      %p293 = por %p291, %p292
      %p295 = scmp.ne.s32.totalorder %s278, %s294
      %p296 = scmp.eq.s32.totalorder %s24, 0
      %p297 = por %p295, %p296
      %p298 = scmp.le.s32.totalorder 1, %s18
      %p299 = scmp.lt.s32.totalorder %s18, 3
      %p300 = pnand %p298, %p299
      %p301 = pneg %p300
      // Predicated region
      $region9: #{cross_attention_transformer_forward.1} parent=5 // pred_check
        _
      $region10: #{cross_attention_transformer_forward.1} parent=5 // pred_check_branch
        %303 = sbr.rel (%p300) target = $region12
      $region11: #{cross_attention_transformer_forward.1} parent=5 // pred_region
        %s304 = ssub.s32 %s18, 1
        // Predicated region
        $region13: #{cross_attention_transformer_forward.1} parent=11 // pred_check
          %p305 = pneg %p56
        $region14: #{cross_attention_transformer_forward.1} parent=11 // pred_check_branch
          %307 = sbr.rel (%p305) target = $region16
        $region15: #{cross_attention_transformer_forward.1} parent=11 // pred_region
          %s308 = smul.u32 2, %s27
          %s310 = ssub.s32 256, 256
          %311 = vsyncadd [#allocation4], %s310
          %s312 = smul.addr %s308, 128
          %s313 = scalar_lea.hbm %s0, %s312
          %s314 = sshll.u32 [#allocation3], 4
          %s315 = int_to_ptr.vmem [resolvable:$true] %s314
          %320 = dma.hbm_to_vmem [thread:$0]  %s313, 256, %s315, [#allocation4], 128, 128, 8
        $region16: #{cross_attention_transformer_forward.1} parent=11 // pred_fallthru
          _
        // Predicated region
        $region17: #{cross_attention_transformer_forward.1} parent=11 // pred_check
          %p321 = pneg %p82
        $region18: #{cross_attention_transformer_forward.1} parent=11 // pred_check_branch
          %323 = sbr.rel (%p321) target = $region20
        $region19: #{cross_attention_transformer_forward.1} parent=11 // pred_region
          %s324 = smul.u32 2, %s27
          %s326 = ssub.s32 32, 32
          %327 = vsyncadd [#allocation7], %s326
          %s328 = smul.addr %s324, 16
          %s329 = scalar_lea.hbm %s1, %s328
          %s330 = sshll.u32 [#allocation6], 4
          %s331 = int_to_ptr.vmem [resolvable:$true] %s330
          %336 = dma.hbm_to_vmem [thread:$0]  %s329, 32, %s331, [#allocation7], 16, 16, 1
        $region20: #{cross_attention_transformer_forward.1} parent=11 // pred_fallthru
          _
      $region12: #{cross_attention_transformer_forward.1} parent=5 // pred_fallthru
        _
      %p337 = scmp.lt.s32.totalorder %s18, 2
      // Predicated region
      $region21: #{cross_attention_transformer_forward.1} parent=5 // pred_check
        %p338 = pneg %p337
      $region22: #{cross_attention_transformer_forward.1} parent=5 // pred_check_branch
        %340 = sbr.rel (%p338) target = $region24
      $region23: #{cross_attention_transformer_forward.1} parent=5 // pred_region
        // Predicated region
        $region25: #{cross_attention_transformer_forward.1} parent=23 // pred_check
          %p341 = pneg %p102
        $region26: #{cross_attention_transformer_forward.1} parent=23 // pred_check_branch
          %343 = sbr.rel (%p341) target = $region28
        $region27: #{cross_attention_transformer_forward.1} parent=23 // pred_region
          %s344 = sand.u32 %s18, 1
          %s345 = scalar_lea.sflag [#allocation4], %s344
          %s346 = sand.u32 %s92, 1
          %s347 = smul.addr %s346, 16
          %s348 = scalar_lea.vmem [#allocation8], %s347
          %s350 = ssub.s32 256, 256
          %351 = vsyncadd %s345, %s350
          %s352 = smul.addr %s26, 4
          %s353 = smul.addr %s352, 64
          %s354 = scalar_lea.hbm %s2, %s353
          %s355 = sshll.u32 %s348, 4
          %s356 = int_to_ptr.vmem [resolvable:$true] %s355
          %361 = dma.hbm_to_vmem [thread:$0]  %s354, 256, %s356, %s345, 64, 64, 4
        $region28: #{cross_attention_transformer_forward.1} parent=23 // pred_fallthru
          _
        // Predicated region
        $region29: #{cross_attention_transformer_forward.1} parent=23 // pred_check
          %p362 = pneg %p128
        $region30: #{cross_attention_transformer_forward.1} parent=23 // pred_check_branch
          %364 = sbr.rel (%p362) target = $region32
        $region31: #{cross_attention_transformer_forward.1} parent=23 // pred_region
          %s365 = sand.u32 %s18, 1
          %s366 = scalar_lea.sflag [#allocation4], %s365
          %s367 = sand.u32 %s118, 1
          %s368 = scalar_lea.vmem [#allocation9], %s367
          %s370 = ssub.s32 16, 16
          %371 = vsyncadd %s366, %s370
          %s372 = smul.addr %s26, 16
          %s373 = scalar_lea.hbm %s3, %s372
          %s375 = sshll.u32 %s368, 4
          %s376 = int_to_ptr.vmem [resolvable:$true] %s375
          %378 = dma.hbm_to_vmem [thread:$0]  %s373, 16, %s376, %s366
        $region32: #{cross_attention_transformer_forward.1} parent=23 // pred_fallthru
          _
        // Predicated region
        $region33: #{cross_attention_transformer_forward.1} parent=23 // pred_check
          %p379 = pneg %p154
        $region34: #{cross_attention_transformer_forward.1} parent=23 // pred_check_branch
          %381 = sbr.rel (%p379) target = $region36
        $region35: #{cross_attention_transformer_forward.1} parent=23 // pred_region
          %s382 = sand.u32 %s18, 1
          %s383 = scalar_lea.sflag [#allocation4], %s382
          %s384 = sand.u32 %s144, 1
          %s385 = smul.addr %s384, 16
          %s386 = scalar_lea.vmem [#allocation10], %s385
          %s388 = ssub.s32 256, 256
          %389 = vsyncadd %s383, %s388
          %s390 = smul.addr %s26, 4
          %s391 = smul.addr %s390, 64
          %s392 = scalar_lea.hbm %s4, %s391
          %s393 = sshll.u32 %s386, 4
          %s394 = int_to_ptr.vmem [resolvable:$true] %s393
          %399 = dma.hbm_to_vmem [thread:$0]  %s392, 256, %s394, %s383, 64, 64, 4
        $region36: #{cross_attention_transformer_forward.1} parent=23 // pred_fallthru
          _
        // Predicated region
        $region37: #{cross_attention_transformer_forward.1} parent=23 // pred_check
          %p400 = pneg %p180
        $region38: #{cross_attention_transformer_forward.1} parent=23 // pred_check_branch
          %402 = sbr.rel (%p400) target = $region40
        $region39: #{cross_attention_transformer_forward.1} parent=23 // pred_region
          %s403 = sand.u32 %s18, 1
          %s404 = scalar_lea.sflag [#allocation4], %s403
          %s405 = sand.u32 %s170, 1
          %s406 = smul.addr %s405, 8
          %s407 = scalar_lea.vmem [#allocation11], %s406
          %s409 = ssub.s32 128, 128
          %410 = vsyncadd %s404, %s409
          %s411 = smul.addr %s26, 128
          %s412 = scalar_lea.hbm %s5, %s411
          %s414 = sshll.u32 %s407, 4
          %s415 = int_to_ptr.vmem [resolvable:$true] %s414
          %417 = dma.hbm_to_vmem [thread:$0]  %s412, 128, %s415, %s404
        $region40: #{cross_attention_transformer_forward.1} parent=23 // pred_fallthru
          _
        // Predicated region
        $region41: #{cross_attention_transformer_forward.1} parent=23 // pred_check
          %p418 = pneg %p206
        $region42: #{cross_attention_transformer_forward.1} parent=23 // pred_check_branch
          %420 = sbr.rel (%p418) target = $region44
        $region43: #{cross_attention_transformer_forward.1} parent=23 // pred_region
          %s421 = sand.u32 %s18, 1
          %s422 = scalar_lea.sflag [#allocation4], %s421
          %s423 = sand.u32 %s196, 1
          %s424 = smul.addr %s423, 16
          %s425 = scalar_lea.vmem [#allocation12], %s424
          %s427 = ssub.s32 256, 256
          %428 = vsyncadd %s422, %s427
          %s429 = smul.addr %s26, 4
          %s430 = smul.addr %s429, 64
          %s431 = scalar_lea.hbm %s6, %s430
          %s432 = sshll.u32 %s425, 4
          %s433 = int_to_ptr.vmem [resolvable:$true] %s432
          %438 = dma.hbm_to_vmem [thread:$0]  %s431, 256, %s433, %s422, 64, 64, 4
        $region44: #{cross_attention_transformer_forward.1} parent=23 // pred_fallthru
          _
        // Predicated region
        $region45: #{cross_attention_transformer_forward.1} parent=23 // pred_check
          %p439 = pneg %p232
        $region46: #{cross_attention_transformer_forward.1} parent=23 // pred_check_branch
          %441 = sbr.rel (%p439) target = $region48
        $region47: #{cross_attention_transformer_forward.1} parent=23 // pred_region
          %s442 = sand.u32 %s18, 1
          %s443 = scalar_lea.sflag [#allocation4], %s442
          %s444 = sand.u32 %s222, 1
          %s445 = scalar_lea.vmem [#allocation13], %s444
          %s447 = ssub.s32 16, 16
          %448 = vsyncadd %s443, %s447
          %s449 = smul.addr %s26, 16
          %s450 = scalar_lea.hbm %s7, %s449
          %s452 = sshll.u32 %s445, 4
          %s453 = int_to_ptr.vmem [resolvable:$true] %s452
          %455 = dma.hbm_to_vmem [thread:$0]  %s450, 16, %s453, %s443
        $region48: #{cross_attention_transformer_forward.1} parent=23 // pred_fallthru
          _
        // Predicated region
        $region49: #{cross_attention_transformer_forward.1} parent=23 // pred_check
          %p456 = pneg %p258
        $region50: #{cross_attention_transformer_forward.1} parent=23 // pred_check_branch
          %458 = sbr.rel (%p456) target = $region52
        $region51: #{cross_attention_transformer_forward.1} parent=23 // pred_region
          %s459 = sand.u32 %s18, 1
          %s460 = scalar_lea.sflag [#allocation4], %s459
          %s461 = sand.u32 %s248, 1
          %s462 = smul.addr %s461, 32
          %s463 = scalar_lea.vmem [#allocation14], %s462
          %s465 = ssub.s32 512, 512
          %466 = vsyncadd %s460, %s465
          %s467 = smul.addr %s26, 8
          %s468 = smul.addr %s467, 64
          %s469 = scalar_lea.hbm %s8, %s468
          %s470 = sshll.u32 %s463, 4
          %s471 = int_to_ptr.vmem [resolvable:$true] %s470
          %476 = dma.hbm_to_vmem [thread:$0]  %s469, 512, %s471, %s460, 64, 64, 4
        $region52: #{cross_attention_transformer_forward.1} parent=23 // pred_fallthru
          _
      $region24: #{cross_attention_transformer_forward.1} parent=5 // pred_fallthru
        _
      %p477 = scmp.le.s32.totalorder 1, %s18
      %p478 = scmp.lt.s32.totalorder %s18, 3
      %p479 = pnand %p477, %p478
      %p480 = pneg %p479
      // Predicated region
      $region53: #{cross_attention_transformer_forward.1} parent=5 // pred_check
        _
      $region54: #{cross_attention_transformer_forward.1} parent=5 // pred_check_branch
        %482 = sbr.rel (%p479) target = $region56
      $region55: #{cross_attention_transformer_forward.1} parent=5 // pred_region
        %s483 = ssub.s32 %s18, 1
        // Predicated region
        $region57: #{cross_attention_transformer_forward.1} parent=55 // pred_check
          %p484 = pneg %p56
        $region58: #{cross_attention_transformer_forward.1} parent=55 // pred_check_branch
          %486 = sbr.rel (%p484) target = $region60
        $region59: #{cross_attention_transformer_forward.1} parent=55 // pred_region
          %487 = dma.done [#allocation4], 256
        $region60: #{cross_attention_transformer_forward.1} parent=55 // pred_fallthru
          _
        // Predicated region
        $region61: #{cross_attention_transformer_forward.1} parent=55 // pred_check
          %p488 = pneg %p82
        $region62: #{cross_attention_transformer_forward.1} parent=55 // pred_check_branch
          %490 = sbr.rel (%p488) target = $region64
        $region63: #{cross_attention_transformer_forward.1} parent=55 // pred_region
          %491 = dma.done [#allocation7], 32
        $region64: #{cross_attention_transformer_forward.1} parent=55 // pred_fallthru
          _
        %s492 = sand.u32 %s23, 1
        %s493 = scalar_lea.sflag [#allocation4], %s492
        %s494 = sand.u32 %s95, 1
        %s495 = smul.addr %s494, 16
        %s496 = scalar_lea.vmem [#allocation8], %s495
        // Predicated region
        $region65: #{cross_attention_transformer_forward.1} parent=55 // pred_check
          %p497 = pneg %p108
        $region66: #{cross_attention_transformer_forward.1} parent=55 // pred_check_branch
          %499 = sbr.rel (%p497) target = $region68
        $region67: #{cross_attention_transformer_forward.1} parent=55 // pred_region
          %500 = dma.done %s493, 256
        $region68: #{cross_attention_transformer_forward.1} parent=55 // pred_fallthru
          _
        %s501 = sand.u32 %s23, 1
        %s502 = scalar_lea.sflag [#allocation4], %s501
        %s503 = sand.u32 %s121, 1
        %s504 = scalar_lea.vmem [#allocation9], %s503
        // Predicated region
        $region69: #{cross_attention_transformer_forward.1} parent=55 // pred_check
          %p505 = pneg %p134
        $region70: #{cross_attention_transformer_forward.1} parent=55 // pred_check_branch
          %507 = sbr.rel (%p505) target = $region72
        $region71: #{cross_attention_transformer_forward.1} parent=55 // pred_region
          %508 = dma.done %s502, 16
        $region72: #{cross_attention_transformer_forward.1} parent=55 // pred_fallthru
          _
        %s509 = sand.u32 %s23, 1
        %s510 = scalar_lea.sflag [#allocation4], %s509
        %s511 = sand.u32 %s147, 1
        %s512 = smul.addr %s511, 16
        %s513 = scalar_lea.vmem [#allocation10], %s512
        // Predicated region
        $region73: #{cross_attention_transformer_forward.1} parent=55 // pred_check
          %p514 = pneg %p160
        $region74: #{cross_attention_transformer_forward.1} parent=55 // pred_check_branch
          %516 = sbr.rel (%p514) target = $region76
        $region75: #{cross_attention_transformer_forward.1} parent=55 // pred_region
          %517 = dma.done %s510, 256
        $region76: #{cross_attention_transformer_forward.1} parent=55 // pred_fallthru
          _
        %s518 = sand.u32 %s23, 1
        %s519 = scalar_lea.sflag [#allocation4], %s518
        %s520 = sand.u32 %s173, 1
        %s521 = smul.addr %s520, 8
        %s522 = scalar_lea.vmem [#allocation11], %s521
        // Predicated region
        $region77: #{cross_attention_transformer_forward.1} parent=55 // pred_check
          %p523 = pneg %p186
        $region78: #{cross_attention_transformer_forward.1} parent=55 // pred_check_branch
          %525 = sbr.rel (%p523) target = $region80
        $region79: #{cross_attention_transformer_forward.1} parent=55 // pred_region
          %526 = dma.done %s519, 128
        $region80: #{cross_attention_transformer_forward.1} parent=55 // pred_fallthru
          _
        %s527 = sand.u32 %s23, 1
        %s528 = scalar_lea.sflag [#allocation4], %s527
        %s529 = sand.u32 %s199, 1
        %s530 = smul.addr %s529, 16
        %s531 = scalar_lea.vmem [#allocation12], %s530
        // Predicated region
        $region81: #{cross_attention_transformer_forward.1} parent=55 // pred_check
          %p532 = pneg %p212
        $region82: #{cross_attention_transformer_forward.1} parent=55 // pred_check_branch
          %534 = sbr.rel (%p532) target = $region84
        $region83: #{cross_attention_transformer_forward.1} parent=55 // pred_region
          %535 = dma.done %s528, 256
        $region84: #{cross_attention_transformer_forward.1} parent=55 // pred_fallthru
          _
        %s536 = sand.u32 %s23, 1
        %s537 = scalar_lea.sflag [#allocation4], %s536
        %s538 = sand.u32 %s225, 1
        %s539 = scalar_lea.vmem [#allocation13], %s538
        // Predicated region
        $region85: #{cross_attention_transformer_forward.1} parent=55 // pred_check
          %p540 = pneg %p238
        $region86: #{cross_attention_transformer_forward.1} parent=55 // pred_check_branch
          %542 = sbr.rel (%p540) target = $region88
        $region87: #{cross_attention_transformer_forward.1} parent=55 // pred_region
          %543 = dma.done %s537, 16
        $region88: #{cross_attention_transformer_forward.1} parent=55 // pred_fallthru
          _
        %s544 = sand.u32 %s23, 1
        %s545 = scalar_lea.sflag [#allocation4], %s544
        %s546 = sand.u32 %s251, 1
        %s547 = smul.addr %s546, 32
        %s548 = scalar_lea.vmem [#allocation14], %s547
        // Predicated region
        $region89: #{cross_attention_transformer_forward.1} parent=55 // pred_check
          %p549 = pneg %p264
        $region90: #{cross_attention_transformer_forward.1} parent=55 // pred_check_branch
          %551 = sbr.rel (%p549) target = $region92
        $region91: #{cross_attention_transformer_forward.1} parent=55 // pred_region
          %552 = dma.done %s545, 512
        $region92: #{cross_attention_transformer_forward.1} parent=55 // pred_fallthru
          _
        %p553 = pneg %p56
        %p554 = pneg %p53
        %p555 = pneg %p82
        %p556 = pneg %p79
        %s557 = sand.u32 %s23, 1
        %s558 = scalar_lea.sflag [#allocation4], %s557
        %s559 = sand.u32 %s95, 1
        %s560 = smul.addr %s559, 16
        %s561 = scalar_lea.vmem [#allocation8], %s560
        %p562 = pneg %p108
        %p563 = pneg %p105
        %s564 = sand.u32 %s23, 1
        %s565 = scalar_lea.sflag [#allocation4], %s564
        %s566 = sand.u32 %s121, 1
        %s567 = scalar_lea.vmem [#allocation9], %s566
        %p568 = pneg %p134
        %p569 = pneg %p131
        %s570 = sand.u32 %s23, 1
        %s571 = scalar_lea.sflag [#allocation4], %s570
        %s572 = sand.u32 %s147, 1
        %s573 = smul.addr %s572, 16
        %s574 = scalar_lea.vmem [#allocation10], %s573
        %p575 = pneg %p160
        %p576 = pneg %p157
        %s577 = sand.u32 %s23, 1
        %s578 = scalar_lea.sflag [#allocation4], %s577
        %s579 = sand.u32 %s173, 1
        %s580 = smul.addr %s579, 8
        %s581 = scalar_lea.vmem [#allocation11], %s580
        %p582 = pneg %p186
        %p583 = pneg %p183
        %s584 = sand.u32 %s23, 1
        %s585 = scalar_lea.sflag [#allocation4], %s584
        %s586 = sand.u32 %s199, 1
        %s587 = smul.addr %s586, 16
        %s588 = scalar_lea.vmem [#allocation12], %s587
        %p589 = pneg %p212
        %p590 = pneg %p209
        %s591 = sand.u32 %s23, 1
        %s592 = scalar_lea.sflag [#allocation4], %s591
        %s593 = sand.u32 %s225, 1
        %s594 = scalar_lea.vmem [#allocation13], %s593
        %p595 = pneg %p238
        %p596 = pneg %p235
        %s597 = sand.u32 %s23, 1
        %s598 = scalar_lea.sflag [#allocation4], %s597
        %s599 = sand.u32 %s251, 1
        %s600 = smul.addr %s599, 32
        %s601 = scalar_lea.vmem [#allocation14], %s600
        %p602 = pneg %p264
        %p603 = pneg %p261
        %p604 = pneg %p290
        %p605 = pneg %p287
        %s606 = smul.u32 2, %s27
        %s607 = smul.u32 2, %s27
        %s608 = smul.u32 2, %s27
        %p610 = scmp.eq.s32.totalorder %s28, 0
        // Predicated region
        $region93: #{cross_attention_transformer_forward.1} parent=55 // pred_check
          %p611 = pneg %p610
        $region94: #{cross_attention_transformer_forward.1} parent=55 // pred_check_branch
          %613 = sbr.rel (%p611) target = $region96
        $region95: #{cross_attention_transformer_forward.1} parent=55 // pred_region
          %v614 = vld [vmem:[#allocation3] sm:$0xff]
          %v615 = vld [vmem:[#allocation3 + $0x8] sm:$0xff]
          %vm616 = vcmask 261120
          %617 = vst.msk [vmem:[#allocation2] sm:$0xff] %vm616, %v614
          %618 = vst.msk [vmem:[#allocation2 + $0x8] sm:$0xff] %vm616, %v615
        $region96: #{cross_attention_transformer_forward.1} parent=55 // pred_fallthru
          _
        %v619 = vld [vmem:[#allocation2] sm:$0xff]
        %v620 = vld [vmem:[#allocation2 + $0x8] sm:$0xff]
        %v621 = vld [vmem:[%s496] sm:$0xf]
        %v622 = vld [vmem:[%s496 + $0x4] sm:$0xf]
        %v623 = vld [vmem:[%s496 + $0x8] sm:$0xf]
        %v624 = vld [vmem:[%s496 + $0xc] sm:$0xf]
        %v625 = vld [vmem:[%s504] sm:$0x1]
        %v626 = vld [vmem:[%s513] sm:$0xf]
        %v627 = vld [vmem:[%s513 + $0x4] sm:$0xf]
        %v628 = vld [vmem:[%s513 + $0x8] sm:$0xf]
        %v629 = vld [vmem:[%s513 + $0xc] sm:$0xf]
        %v630 = vld [vmem:[%s522] sm:$0x3f]
        %v631 = vld [vmem:[%s531] sm:$0xf]
        %v632 = vld [vmem:[%s531 + $0x4] sm:$0xf]
        %v633 = vld [vmem:[%s531 + $0x8] sm:$0xf]
        %v634 = vld [vmem:[%s531 + $0xc] sm:$0xf]
        %v635 = vld [vmem:[%s539] sm:$0x1]
        %v636 = vld [vmem:[%s548] sm:$0xf]
        %v637 = vld [vmem:[%s548 + $0x4] sm:$0xf]
        %v638 = vld [vmem:[%s548 + $0x8] sm:$0xf]
        %v639 = vld [vmem:[%s548 + $0xc] sm:$0xf]
        %v640 = vld [vmem:[%s548 + $0x10] sm:$0xf]
        %v641 = vld [vmem:[%s548 + $0x14] sm:$0xf]
        %v642 = vld [vmem:[%s548 + $0x18] sm:$0xf]
        %v643 = vld [vmem:[%s548 + $0x1c] sm:$0xf]
        %v644 = vpack.c.bf16 %v620, %v619
        %v646 = vlaneseq
        %v647 = vshrl.u32 %v646, 7
        %v648 = vsub.s32 0, %v647
        %v649 = vrot.slane %v625, %v648
        %v655 = vunpack.c.l.b16 %v621
        %v656 = vunpack.c.l.b16 %v622
        %v657 = vunpack.c.l.b16 %v623
        %v658 = vunpack.c.l.b16 %v624
        %v659 = vpack.c.b16 %v656, %v655
        %v660 = vpack.c.b16 %v658, %v657
        %vm663 = vcmask 261120
        %v665 = vsel %vm663, %v644, 0
        %667 = vmatprep.subr.bf16.mxu0 0
        %668 = vmatpush1.bf16.msra.mxu0 %v659
        %669 = vmatprep.subr.bf16.mxu0 0
        %670 = vmatpush1.bf16.msra.mxu0 %v660
        %671 = vmatprep.subr.bf16.mxu0 0
        %672 = vmatpush1.bf16.msra.mxu0 0
        %673 = vmatprep.subr.bf16.mxu0 0
        %674 = vmatpush1.bf16.msra.mxu0 0
        %675 = vmatprep.subr.bf16.mxu0 0
        %676 = vmatpush1.bf16.msra.mxu0 0
        %677 = vmatprep.subr.bf16.mxu0 0
        %678 = vmatpush1.bf16.msra.mxu0 0
        %679 = vmatprep.subr.bf16.mxu0 0
        %680 = vmatpush1.bf16.msra.mxu0 0
        %681 = vmatprep.subr.bf16.mxu0 0
        %682 = vmatpush1.bf16.msra.mxu0 0
        %683 = vmatprep.subr.bf16.mxu0 0
        %684 = vmatpush1.bf16.msra.mxu0 0
        %685 = vmatprep.subr.bf16.mxu0 0
        %686 = vmatpush1.bf16.msra.mxu0 0
        %687 = vmatprep.subr.bf16.mxu0 0
        %688 = vmatpush1.bf16.msra.mxu0 0
        %689 = vmatprep.subr.bf16.mxu0 0
        %690 = vmatpush1.bf16.msra.mxu0 0
        %691 = vmatprep.subr.bf16.mxu0 0
        %692 = vmatpush1.bf16.msra.mxu0 0
        %693 = vmatprep.subr.bf16.mxu0 0
        %694 = vmatpush1.bf16.msra.mxu0 0
        %695 = vmatprep.subr.bf16.mxu0 0
        %696 = vmatpush1.bf16.msra.mxu0 0
        %697 = vmatprep.subr.bf16.mxu0 0
        %698 = vmatpush1.bf16.msra.mxu0 0
        %699 = vmatprep.mubr.bf16.mxu0 0
        %700 = vmatmul.mubr.bf16.gmra.mrb[0].mxu0 %v665
        %v701 = vpop.f32.mrb[0].mxu0
        %v702 = vadd.f32 %v649, %v701
        %v703 = vpop.f32.mrb[0].mxu0
        %v704 = vpop.f32.mrb[0].mxu0
        %v705 = vadd.f32 %v649, %v704
        %v706 = vpop.f32.mrb[0].mxu0
        %707 = vdwg.mxu0
        %v708 = vlaneseq
        %v709 = vshrl.u32 %v708, 7
        %v710 = vlaneseq
        %v711 = vand.u32 %v710, 127
        %vm712 = vcmp.lt.s32.totalorder %v709, 2
        %vm713 = vcmp.ge.s32.totalorder %v711, 2
        %vm714 = vmand %vm712, %vm713
        %v715 = vsel %vm714, -1e+30, 0.0
        %v716 = vld [vmem:[#allocation6] sm:$0x1]
        %v717 = vld [vmem:[#allocation6 + $0x1] sm:$0x1]
        %v720 = vlaneseq
        %v721 = vshrl.u32 %v720, 7
        %v722 = vsub.s32 0, %v721
        %v723 = vrot.slane %v716, %v722
        %v724 = vlaneseq
        %v725 = vshrl.u32 %v724, 7
        %v726 = vsub.s32 0, %v725
        %v727 = vrot.slane %v717, %v726
        %v730 = vadd.f32 %v715, %v723
        %v731 = vadd.f32 %v715, %v727
        %v732 = vpack.c.bf16 %v702, %v702
        %v733 = vpack.c.bf16 %v705, %v705
        %735 = vrot.lane.b32.xlu0 %v732, 96
        %v736 = vpop.permute.xlu0 %735
        %vm737 = vcmask 64512
        %v739 = vsel %vm737, %v732, 0
        %v742 = vsel %vm737, %v736, 0
        %744 = vmatprep.subr.bf16.mxu0 0
        %745 = vmatpush1.bf16.xpose.msra.mxu0 %v742
        %746 = vmatprep.subr.bf16.mxu0 0
        %747 = vmatpush1.bf16.xpose.msra.mxu0 0
        %748 = vmatprep.subr.bf16.mxu0 0
        %749 = vmatpush1.bf16.xpose.msra.mxu0 0
        %750 = vmatprep.subr.bf16.mxu0 0
        %751 = vmatpush1.bf16.xpose.msra.mxu0 0
        %752 = vmatprep.subr.bf16.mxu0 0
        %753 = vmatpush1.bf16.xpose.msra.mxu0 0
        %754 = vmatprep.subr.bf16.mxu0 0
        %755 = vmatpush1.bf16.xpose.msra.mxu0 0
        %756 = vmatprep.subr.bf16.mxu0 0
        %757 = vmatpush1.bf16.xpose.msra.mxu0 0
        %758 = vmatprep.subr.bf16.mxu0 0
        %759 = vmatpush1.bf16.xpose.msra.mxu0 0
        %760 = vmatprep.subr.bf16.mxu0 0
        %761 = vmatpush1.bf16.xpose.msra.mxu0 0
        %762 = vmatprep.subr.bf16.mxu0 0
        %763 = vmatpush1.bf16.xpose.msra.mxu0 0
        %764 = vmatprep.subr.bf16.mxu0 0
        %765 = vmatpush1.bf16.xpose.msra.mxu0 0
        %766 = vmatprep.subr.bf16.mxu0 0
        %767 = vmatpush1.bf16.xpose.msra.mxu0 0
        %768 = vmatprep.subr.bf16.mxu0 0
        %769 = vmatpush1.bf16.xpose.msra.mxu0 0
        %770 = vmatprep.subr.bf16.mxu0 0
        %771 = vmatpush1.bf16.xpose.msra.mxu0 0
        %772 = vmatprep.subr.bf16.mxu0 0
        %773 = vmatpush1.bf16.xpose.msra.mxu0 0
        %774 = vmatprep.subr.bf16.mxu0 0
        %775 = vmatpush1.bf16.xpose.msra.mxu0 0
        %776 = vmatprep.mubr.bf16.mxu0 0
        %777 = vmatmul.mubr.bf16.gmra.mrb[0].mxu0 %v739
        %v778 = vpop.f32.mrb[0].mxu0
        %v779 = vadd.f32 %v730, %v778
        %v780 = vpop.f32.mrb[0].mxu0
        %v781 = vpop.f32.mrb[0].mxu0
        %v782 = vpop.f32.mrb[0].mxu0
        %783 = vdwg.mxu0
        %785 = vrot.lane.b32.xlu0 %v733, 96
        %v786 = vpop.permute.xlu0 %785
        %v788 = vsel %vm737, %v733, 0
        %v791 = vsel %vm737, %v786, 0
        %793 = vmatprep.subr.bf16.mxu0 0
        %794 = vmatpush1.bf16.xpose.msra.mxu0 %v791
        %795 = vmatprep.subr.bf16.mxu0 0
        %796 = vmatpush1.bf16.xpose.msra.mxu0 0
        %797 = vmatprep.subr.bf16.mxu0 0
        %798 = vmatpush1.bf16.xpose.msra.mxu0 0
        %799 = vmatprep.subr.bf16.mxu0 0
        %800 = vmatpush1.bf16.xpose.msra.mxu0 0
        %801 = vmatprep.subr.bf16.mxu0 0
        %802 = vmatpush1.bf16.xpose.msra.mxu0 0
        %803 = vmatprep.subr.bf16.mxu0 0
        %804 = vmatpush1.bf16.xpose.msra.mxu0 0
        %805 = vmatprep.subr.bf16.mxu0 0
        %806 = vmatpush1.bf16.xpose.msra.mxu0 0
        %807 = vmatprep.subr.bf16.mxu0 0
        %808 = vmatpush1.bf16.xpose.msra.mxu0 0
        %809 = vmatprep.subr.bf16.mxu0 0
        %810 = vmatpush1.bf16.xpose.msra.mxu0 0
        %811 = vmatprep.subr.bf16.mxu0 0
        %812 = vmatpush1.bf16.xpose.msra.mxu0 0
        %813 = vmatprep.subr.bf16.mxu0 0
        %814 = vmatpush1.bf16.xpose.msra.mxu0 0
        %815 = vmatprep.subr.bf16.mxu0 0
        %816 = vmatpush1.bf16.xpose.msra.mxu0 0
        %817 = vmatprep.subr.bf16.mxu0 0
        %818 = vmatpush1.bf16.xpose.msra.mxu0 0
        %819 = vmatprep.subr.bf16.mxu0 0
        %820 = vmatpush1.bf16.xpose.msra.mxu0 0
        %821 = vmatprep.subr.bf16.mxu0 0
        %822 = vmatpush1.bf16.xpose.msra.mxu0 0
        %823 = vmatprep.subr.bf16.mxu0 0
        %824 = vmatpush1.bf16.xpose.msra.mxu0 0
        %825 = vmatprep.mubr.bf16.mxu0 0
        %826 = vmatmul.mubr.bf16.gmra.mrb[0].mxu0 %v788
        %v827 = vpop.f32.mrb[0].mxu0
        %v828 = vadd.f32 %v731, %v827
        %v829 = vpop.f32.mrb[0].mxu0
        %v830 = vpop.f32.mrb[0].mxu0
        %v831 = vpop.f32.mrb[0].mxu0
        %832 = vdwg.mxu0
        %v833 = vsel %vm737, %v779, -inf
        %834 = vmax.xlane.f32.xlu0 %v833
        %v835 = vpop.xlane.xlu0 %834
        %v836 = vsel %vm737, %v828, -inf
        %837 = vmax.xlane.f32.xlu0 %v836
        %v838 = vpop.xlane.xlu0 %837
        %v839 = vsub.f32 %v779, %v835
        %v840 = vsub.f32 %v828, %v838
        %v841 = vmul.f32 %v839, 1.442695
        %v842 = vpow.pop %v841
        %v843 = vmul.f32 %v840, 1.442695
        %v844 = vpow.pop %v843
        %v845 = vsel %vm737, %v842, 0.0
        %846 = vadd.xlane.f32.xlu0 %v845
        %v847 = vpop.xlane.xlu0 %846
        %v848 = vsel %vm737, %v844, 0.0
        %849 = vadd.xlane.f32.xlu0 %v848
        %v850 = vpop.xlane.xlu0 %849
        %v851 = vrcp.pop %v847
        %v852 = vrcp.pop %v850
        %v853 = vmul.f32 %v842, %v851
        %v854 = vmul.f32 %v844, %v852
        %v855 = vpack.c.bf16 %v853, %v853
        %v856 = vpack.c.bf16 %v854, %v854
        %857 = vrot.lane.b32.xlu0 %v732, 64
        %v858 = vpop.permute.xlu0 %857
        %v860 = vsel %vm737, %v855, 0
        %vm862 = vcmask 1043456
        %v864 = vsel %vm862, %v858, 0
        %866 = vmatprep.subr.bf16.mxu0 0
        %867 = vmatpush1.bf16.msra.mxu0 %v864
        %868 = vmatprep.subr.bf16.mxu0 0
        %869 = vmatpush1.bf16.msra.mxu0 0
        %870 = vmatprep.subr.bf16.mxu0 0
        %871 = vmatpush1.bf16.msra.mxu0 0
        %872 = vmatprep.subr.bf16.mxu0 0
        %873 = vmatpush1.bf16.msra.mxu0 0
        %874 = vmatprep.subr.bf16.mxu0 0
        %875 = vmatpush1.bf16.msra.mxu0 0
        %876 = vmatprep.subr.bf16.mxu0 0
        %877 = vmatpush1.bf16.msra.mxu0 0
        %878 = vmatprep.subr.bf16.mxu0 0
        %879 = vmatpush1.bf16.msra.mxu0 0
        %880 = vmatprep.subr.bf16.mxu0 0
        %881 = vmatpush1.bf16.msra.mxu0 0
        %882 = vmatprep.subr.bf16.mxu0 0
        %883 = vmatpush1.bf16.msra.mxu0 0
        %884 = vmatprep.subr.bf16.mxu0 0
        %885 = vmatpush1.bf16.msra.mxu0 0
        %886 = vmatprep.subr.bf16.mxu0 0
        %887 = vmatpush1.bf16.msra.mxu0 0
        %888 = vmatprep.subr.bf16.mxu0 0
        %889 = vmatpush1.bf16.msra.mxu0 0
        %890 = vmatprep.subr.bf16.mxu0 0
        %891 = vmatpush1.bf16.msra.mxu0 0
        %892 = vmatprep.subr.bf16.mxu0 0
        %893 = vmatpush1.bf16.msra.mxu0 0
        %894 = vmatprep.subr.bf16.mxu0 0
        %895 = vmatpush1.bf16.msra.mxu0 0
        %896 = vmatprep.subr.bf16.mxu0 0
        %897 = vmatpush1.bf16.msra.mxu0 0
        %898 = vmatprep.mubr.bf16.mxu0 0
        %899 = vmatmul.mubr.bf16.gmra.mrb[0].mxu0 %v860
        %v900 = vpop.f32.mrb[0].mxu0
        %v901 = vadd.f32 0.0, %v900
        %v902 = vpop.f32.mrb[0].mxu0
        %v903 = vpop.f32.mrb[0].mxu0
        %v904 = vpop.f32.mrb[0].mxu0
        %905 = vdwg.mxu0
        %906 = vrot.lane.b32.xlu0 %v733, 64
        %v907 = vpop.permute.xlu0 %906
        %v909 = vsel %vm737, %v856, 0
        %v912 = vsel %vm862, %v907, 0
        %914 = vmatprep.subr.bf16.mxu0 0
        %915 = vmatpush1.bf16.msra.mxu0 %v912
        %916 = vmatprep.subr.bf16.mxu0 0
        %917 = vmatpush1.bf16.msra.mxu0 0
        %918 = vmatprep.subr.bf16.mxu0 0
        %919 = vmatpush1.bf16.msra.mxu0 0
        %920 = vmatprep.subr.bf16.mxu0 0
        %921 = vmatpush1.bf16.msra.mxu0 0
        %922 = vmatprep.subr.bf16.mxu0 0
        %923 = vmatpush1.bf16.msra.mxu0 0
        %924 = vmatprep.subr.bf16.mxu0 0
        %925 = vmatpush1.bf16.msra.mxu0 0
        %926 = vmatprep.subr.bf16.mxu0 0
        %927 = vmatpush1.bf16.msra.mxu0 0
        %928 = vmatprep.subr.bf16.mxu0 0
        %929 = vmatpush1.bf16.msra.mxu0 0
        %930 = vmatprep.subr.bf16.mxu0 0
        %931 = vmatpush1.bf16.msra.mxu0 0
        %932 = vmatprep.subr.bf16.mxu0 0
        %933 = vmatpush1.bf16.msra.mxu0 0
        %934 = vmatprep.subr.bf16.mxu0 0
        %935 = vmatpush1.bf16.msra.mxu0 0
        %936 = vmatprep.subr.bf16.mxu0 0
        %937 = vmatpush1.bf16.msra.mxu0 0
        %938 = vmatprep.subr.bf16.mxu0 0
        %939 = vmatpush1.bf16.msra.mxu0 0
        %940 = vmatprep.subr.bf16.mxu0 0
        %941 = vmatpush1.bf16.msra.mxu0 0
        %942 = vmatprep.subr.bf16.mxu0 0
        %943 = vmatpush1.bf16.msra.mxu0 0
        %944 = vmatprep.subr.bf16.mxu0 0
        %945 = vmatpush1.bf16.msra.mxu0 0
        %946 = vmatprep.mubr.bf16.mxu0 0
        %947 = vmatmul.mubr.bf16.gmra.mrb[0].mxu0 %v909
        %v948 = vpop.f32.mrb[0].mxu0
        %v949 = vadd.f32 0.0, %v948
        %v950 = vpop.f32.mrb[0].mxu0
        %v951 = vpop.f32.mrb[0].mxu0
        %v952 = vpop.f32.mrb[0].mxu0
        %953 = vdwg.mxu0
        %954 = vrot.lane.b32.xlu0 %v732, 120
        %v955 = vpop.permute.xlu0 %954
        %956 = vrot.lane.b32.xlu0 %v732, 88
        %v957 = vpop.permute.xlu0 %956
        %v959 = vsel %vm737, %v955, 0
        %v962 = vsel %vm737, %v957, 0
        %964 = vmatprep.subr.bf16.mxu0 0
        %965 = vmatpush1.bf16.xpose.msra.mxu0 %v962
        %966 = vmatprep.subr.bf16.mxu0 0
        %967 = vmatpush1.bf16.xpose.msra.mxu0 0
        %968 = vmatprep.subr.bf16.mxu0 0
        %969 = vmatpush1.bf16.xpose.msra.mxu0 0
        %970 = vmatprep.subr.bf16.mxu0 0
        %971 = vmatpush1.bf16.xpose.msra.mxu0 0
        %972 = vmatprep.subr.bf16.mxu0 0
        %973 = vmatpush1.bf16.xpose.msra.mxu0 0
        %974 = vmatprep.subr.bf16.mxu0 0
        %975 = vmatpush1.bf16.xpose.msra.mxu0 0
        %976 = vmatprep.subr.bf16.mxu0 0
        %977 = vmatpush1.bf16.xpose.msra.mxu0 0
        %978 = vmatprep.subr.bf16.mxu0 0
        %979 = vmatpush1.bf16.xpose.msra.mxu0 0
        %980 = vmatprep.subr.bf16.mxu0 0
        %981 = vmatpush1.bf16.xpose.msra.mxu0 0
        %982 = vmatprep.subr.bf16.mxu0 0
        %983 = vmatpush1.bf16.xpose.msra.mxu0 0
        %984 = vmatprep.subr.bf16.mxu0 0
        %985 = vmatpush1.bf16.xpose.msra.mxu0 0
        %986 = vmatprep.subr.bf16.mxu0 0
        %987 = vmatpush1.bf16.xpose.msra.mxu0 0
        %988 = vmatprep.subr.bf16.mxu0 0
        %989 = vmatpush1.bf16.xpose.msra.mxu0 0
        %990 = vmatprep.subr.bf16.mxu0 0
        %991 = vmatpush1.bf16.xpose.msra.mxu0 0
        %992 = vmatprep.subr.bf16.mxu0 0
        %993 = vmatpush1.bf16.xpose.msra.mxu0 0
        %994 = vmatprep.subr.bf16.mxu0 0
        %995 = vmatpush1.bf16.xpose.msra.mxu0 0
        %996 = vmatprep.mubr.bf16.mxu0 0
        %997 = vmatmul.mubr.bf16.gmra.mrb[0].mxu0 %v959
        %v998 = vpop.f32.mrb[0].mxu0
        %v999 = vadd.f32 %v730, %v998
        %v1000 = vpop.f32.mrb[0].mxu0
        %v1001 = vpop.f32.mrb[0].mxu0
        %v1002 = vpop.f32.mrb[0].mxu0
        %1003 = vdwg.mxu0
        %1004 = vrot.lane.b32.xlu0 %v733, 120
        %v1005 = vpop.permute.xlu0 %1004
        %1006 = vrot.lane.b32.xlu0 %v733, 88
        %v1007 = vpop.permute.xlu0 %1006
        %v1009 = vsel %vm737, %v1005, 0
        %v1012 = vsel %vm737, %v1007, 0
        %1014 = vmatprep.subr.bf16.mxu0 0
        %1015 = vmatpush1.bf16.xpose.msra.mxu0 %v1012
        %1016 = vmatprep.subr.bf16.mxu0 0
        %1017 = vmatpush1.bf16.xpose.msra.mxu0 0
        %1018 = vmatprep.subr.bf16.mxu0 0
        %1019 = vmatpush1.bf16.xpose.msra.mxu0 0
        %1020 = vmatprep.subr.bf16.mxu0 0
        %1021 = vmatpush1.bf16.xpose.msra.mxu0 0
        %1022 = vmatprep.subr.bf16.mxu0 0
        %1023 = vmatpush1.bf16.xpose.msra.mxu0 0
        %1024 = vmatprep.subr.bf16.mxu0 0
        %1025 = vmatpush1.bf16.xpose.msra.mxu0 0
        %1026 = vmatprep.subr.bf16.mxu0 0
        %1027 = vmatpush1.bf16.xpose.msra.mxu0 0
        %1028 = vmatprep.subr.bf16.mxu0 0
        %1029 = vmatpush1.bf16.xpose.msra.mxu0 0
        %1030 = vmatprep.subr.bf16.mxu0 0
        %1031 = vmatpush1.bf16.xpose.msra.mxu0 0
        %1032 = vmatprep.subr.bf16.mxu0 0
        %1033 = vmatpush1.bf16.xpose.msra.mxu0 0
        %1034 = vmatprep.subr.bf16.mxu0 0
        %1035 = vmatpush1.bf16.xpose.msra.mxu0 0
        %1036 = vmatprep.subr.bf16.mxu0 0
        %1037 = vmatpush1.bf16.xpose.msra.mxu0 0
        %1038 = vmatprep.subr.bf16.mxu0 0
        %1039 = vmatpush1.bf16.xpose.msra.mxu0 0
        %1040 = vmatprep.subr.bf16.mxu0 0
        %1041 = vmatpush1.bf16.xpose.msra.mxu0 0
        %1042 = vmatprep.subr.bf16.mxu0 0
        %1043 = vmatpush1.bf16.xpose.msra.mxu0 0
        %1044 = vmatprep.subr.bf16.mxu0 0
        %1045 = vmatpush1.bf16.xpose.msra.mxu0 0
        %1046 = vmatprep.mubr.bf16.mxu0 0
        %1047 = vmatmul.mubr.bf16.gmra.mrb[0].mxu0 %v1009
        %v1048 = vpop.f32.mrb[0].mxu0
        %v1049 = vadd.f32 %v731, %v1048
        %v1050 = vpop.f32.mrb[0].mxu0
        %v1051 = vpop.f32.mrb[0].mxu0
        %v1052 = vpop.f32.mrb[0].mxu0
        %1053 = vdwg.mxu0
        %v1054 = vsel %vm737, %v999, -inf
        %1055 = vmax.xlane.f32.xlu0 %v1054
        %v1056 = vpop.xlane.xlu0 %1055
        %v1057 = vsel %vm737, %v1049, -inf
        %1058 = vmax.xlane.f32.xlu0 %v1057
        %v1059 = vpop.xlane.xlu0 %1058
        %v1060 = vsub.f32 %v999, %v1056
        %v1061 = vsub.f32 %v1049, %v1059
        %v1062 = vmul.f32 %v1060, 1.442695
        %v1063 = vpow.pop %v1062
        %v1064 = vmul.f32 %v1061, 1.442695
        %v1065 = vpow.pop %v1064
        %v1066 = vsel %vm737, %v1063, 0.0
        %1067 = vadd.xlane.f32.xlu0 %v1066
        %v1068 = vpop.xlane.xlu0 %1067
        %v1069 = vsel %vm737, %v1065, 0.0
        %1070 = vadd.xlane.f32.xlu0 %v1069
        %v1071 = vpop.xlane.xlu0 %1070
        %v1072 = vrcp.pop %v1068
        %v1073 = vrcp.pop %v1071
        %v1074 = vmul.f32 %v1063, %v1072
        %v1075 = vmul.f32 %v1065, %v1073
        %v1076 = vpack.c.bf16 %v1074, %v1074
        %v1077 = vpack.c.bf16 %v1075, %v1075
        %1078 = vrot.lane.b32.xlu0 %v732, 56
        %v1079 = vpop.permute.xlu0 %1078
        %v1081 = vsel %vm737, %v1076, 0
        %v1084 = vsel %vm862, %v1079, 0
        %1086 = vmatprep.subr.bf16.mxu0 0
        %1087 = vmatpush1.bf16.msra.mxu0 %v1084
        %1088 = vmatprep.subr.bf16.mxu0 0
        %1089 = vmatpush1.bf16.msra.mxu0 0
        %1090 = vmatprep.subr.bf16.mxu0 0
        %1091 = vmatpush1.bf16.msra.mxu0 0
        %1092 = vmatprep.subr.bf16.mxu0 0
        %1093 = vmatpush1.bf16.msra.mxu0 0
        %1094 = vmatprep.subr.bf16.mxu0 0
        %1095 = vmatpush1.bf16.msra.mxu0 0
        %1096 = vmatprep.subr.bf16.mxu0 0
        %1097 = vmatpush1.bf16.msra.mxu0 0
        %1098 = vmatprep.subr.bf16.mxu0 0
        %1099 = vmatpush1.bf16.msra.mxu0 0
        %1100 = vmatprep.subr.bf16.mxu0 0
        %1101 = vmatpush1.bf16.msra.mxu0 0
        %1102 = vmatprep.subr.bf16.mxu0 0
        %1103 = vmatpush1.bf16.msra.mxu0 0
        %1104 = vmatprep.subr.bf16.mxu0 0
        %1105 = vmatpush1.bf16.msra.mxu0 0
        %1106 = vmatprep.subr.bf16.mxu0 0
        %1107 = vmatpush1.bf16.msra.mxu0 0
        %1108 = vmatprep.subr.bf16.mxu0 0
        %1109 = vmatpush1.bf16.msra.mxu0 0
        %1110 = vmatprep.subr.bf16.mxu0 0
        %1111 = vmatpush1.bf16.msra.mxu0 0
        %1112 = vmatprep.subr.bf16.mxu0 0
        %1113 = vmatpush1.bf16.msra.mxu0 0
        %1114 = vmatprep.subr.bf16.mxu0 0
        %1115 = vmatpush1.bf16.msra.mxu0 0
        %1116 = vmatprep.subr.bf16.mxu0 0
        %1117 = vmatpush1.bf16.msra.mxu0 0
        %1118 = vmatprep.mubr.bf16.mxu0 0
        %1119 = vmatmul.mubr.bf16.gmra.mrb[0].mxu0 %v1081
        %v1120 = vpop.f32.mrb[0].mxu0
        %v1121 = vadd.f32 0.0, %v1120
        %v1122 = vpop.f32.mrb[0].mxu0
        %v1123 = vpop.f32.mrb[0].mxu0
        %v1124 = vpop.f32.mrb[0].mxu0
        %1125 = vdwg.mxu0
        %1126 = vrot.lane.b32.xlu0 %v733, 56
        %v1127 = vpop.permute.xlu0 %1126
        %v1129 = vsel %vm737, %v1077, 0
        %v1132 = vsel %vm862, %v1127, 0
        %1134 = vmatprep.subr.bf16.mxu0 0
        %1135 = vmatpush1.bf16.msra.mxu0 %v1132
        %1136 = vmatprep.subr.bf16.mxu0 0
        %1137 = vmatpush1.bf16.msra.mxu0 0
        %1138 = vmatprep.subr.bf16.mxu0 0
        %1139 = vmatpush1.bf16.msra.mxu0 0
        %1140 = vmatprep.subr.bf16.mxu0 0
        %1141 = vmatpush1.bf16.msra.mxu0 0
        %1142 = vmatprep.subr.bf16.mxu0 0
        %1143 = vmatpush1.bf16.msra.mxu0 0
        %1144 = vmatprep.subr.bf16.mxu0 0
        %1145 = vmatpush1.bf16.msra.mxu0 0
        %1146 = vmatprep.subr.bf16.mxu0 0
        %1147 = vmatpush1.bf16.msra.mxu0 0
        %1148 = vmatprep.subr.bf16.mxu0 0
        %1149 = vmatpush1.bf16.msra.mxu0 0
        %1150 = vmatprep.subr.bf16.mxu0 0
        %1151 = vmatpush1.bf16.msra.mxu0 0
        %1152 = vmatprep.subr.bf16.mxu0 0
        %1153 = vmatpush1.bf16.msra.mxu0 0
        %1154 = vmatprep.subr.bf16.mxu0 0
        %1155 = vmatpush1.bf16.msra.mxu0 0
        %1156 = vmatprep.subr.bf16.mxu0 0
        %1157 = vmatpush1.bf16.msra.mxu0 0
        %1158 = vmatprep.subr.bf16.mxu0 0
        %1159 = vmatpush1.bf16.msra.mxu0 0
        %1160 = vmatprep.subr.bf16.mxu0 0
        %1161 = vmatpush1.bf16.msra.mxu0 0
        %1162 = vmatprep.subr.bf16.mxu0 0
        %1163 = vmatpush1.bf16.msra.mxu0 0
        %1164 = vmatprep.subr.bf16.mxu0 0
        %1165 = vmatpush1.bf16.msra.mxu0 0
        %1166 = vmatprep.mubr.bf16.mxu0 0
        %1167 = vmatmul.mubr.bf16.gmra.mrb[0].mxu0 %v1129
        %v1168 = vpop.f32.mrb[0].mxu0
        %v1169 = vadd.f32 0.0, %v1168
        %v1170 = vpop.f32.mrb[0].mxu0
        %v1171 = vpop.f32.mrb[0].mxu0
        %v1172 = vpop.f32.mrb[0].mxu0
        %1173 = vdwg.mxu0
        %1174 = vrot.lane.b32.xlu0 %v732, 112
        %v1175 = vpop.permute.xlu0 %1174
        %1176 = vrot.lane.b32.xlu0 %v732, 80
        %v1177 = vpop.permute.xlu0 %1176
        %v1179 = vsel %vm737, %v1175, 0
        %v1182 = vsel %vm737, %v1177, 0
        %1184 = vmatprep.subr.bf16.mxu0 0
        %1185 = vmatpush1.bf16.xpose.msra.mxu0 %v1182
        %1186 = vmatprep.subr.bf16.mxu0 0
        %1187 = vmatpush1.bf16.xpose.msra.mxu0 0
        %1188 = vmatprep.subr.bf16.mxu0 0
        %1189 = vmatpush1.bf16.xpose.msra.mxu0 0
        %1190 = vmatprep.subr.bf16.mxu0 0
        %1191 = vmatpush1.bf16.xpose.msra.mxu0 0
        %1192 = vmatprep.subr.bf16.mxu0 0
        %1193 = vmatpush1.bf16.xpose.msra.mxu0 0
        %1194 = vmatprep.subr.bf16.mxu0 0
        %1195 = vmatpush1.bf16.xpose.msra.mxu0 0
        %1196 = vmatprep.subr.bf16.mxu0 0
        %1197 = vmatpush1.bf16.xpose.msra.mxu0 0
        %1198 = vmatprep.subr.bf16.mxu0 0
        %1199 = vmatpush1.bf16.xpose.msra.mxu0 0
        %1200 = vmatprep.subr.bf16.mxu0 0
        %1201 = vmatpush1.bf16.xpose.msra.mxu0 0
        %1202 = vmatprep.subr.bf16.mxu0 0
        %1203 = vmatpush1.bf16.xpose.msra.mxu0 0
        %1204 = vmatprep.subr.bf16.mxu0 0
        %1205 = vmatpush1.bf16.xpose.msra.mxu0 0
        %1206 = vmatprep.subr.bf16.mxu0 0
        %1207 = vmatpush1.bf16.xpose.msra.mxu0 0
        %1208 = vmatprep.subr.bf16.mxu0 0
        %1209 = vmatpush1.bf16.xpose.msra.mxu0 0
        %1210 = vmatprep.subr.bf16.mxu0 0
        %1211 = vmatpush1.bf16.xpose.msra.mxu0 0
        %1212 = vmatprep.subr.bf16.mxu0 0
        %1213 = vmatpush1.bf16.xpose.msra.mxu0 0
        %1214 = vmatprep.subr.bf16.mxu0 0
        %1215 = vmatpush1.bf16.xpose.msra.mxu0 0
        %1216 = vmatprep.mubr.bf16.mxu0 0
        %1217 = vmatmul.mubr.bf16.gmra.mrb[0].mxu0 %v1179
        %v1218 = vpop.f32.mrb[0].mxu0
        %v1219 = vadd.f32 %v730, %v1218
        %v1220 = vpop.f32.mrb[0].mxu0
        %v1221 = vpop.f32.mrb[0].mxu0
        %v1222 = vpop.f32.mrb[0].mxu0
        %1223 = vdwg.mxu0
        %1224 = vrot.lane.b32.xlu0 %v733, 112
        %v1225 = vpop.permute.xlu0 %1224
        %1226 = vrot.lane.b32.xlu0 %v733, 80
        %v1227 = vpop.permute.xlu0 %1226
        %v1229 = vsel %vm737, %v1225, 0
        %v1232 = vsel %vm737, %v1227, 0
        %1234 = vmatprep.subr.bf16.mxu0 0
        %1235 = vmatpush1.bf16.xpose.msra.mxu0 %v1232
        %1236 = vmatprep.subr.bf16.mxu0 0
        %1237 = vmatpush1.bf16.xpose.msra.mxu0 0
        %1238 = vmatprep.subr.bf16.mxu0 0
        %1239 = vmatpush1.bf16.xpose.msra.mxu0 0
        %1240 = vmatprep.subr.bf16.mxu0 0
        %1241 = vmatpush1.bf16.xpose.msra.mxu0 0
        %1242 = vmatprep.subr.bf16.mxu0 0
        %1243 = vmatpush1.bf16.xpose.msra.mxu0 0
        %1244 = vmatprep.subr.bf16.mxu0 0
        %1245 = vmatpush1.bf16.xpose.msra.mxu0 0
        %1246 = vmatprep.subr.bf16.mxu0 0
        %1247 = vmatpush1.bf16.xpose.msra.mxu0 0
        %1248 = vmatprep.subr.bf16.mxu0 0
        %1249 = vmatpush1.bf16.xpose.msra.mxu0 0
        %1250 = vmatprep.subr.bf16.mxu0 0
        %1251 = vmatpush1.bf16.xpose.msra.mxu0 0
        %1252 = vmatprep.subr.bf16.mxu0 0
        %1253 = vmatpush1.bf16.xpose.msra.mxu0 0
        %1254 = vmatprep.subr.bf16.mxu0 0
        %1255 = vmatpush1.bf16.xpose.msra.mxu0 0
        %1256 = vmatprep.subr.bf16.mxu0 0
        %1257 = vmatpush1.bf16.xpose.msra.mxu0 0
        %1258 = vmatprep.subr.bf16.mxu0 0
        %1259 = vmatpush1.bf16.xpose.msra.mxu0 0
        %1260 = vmatprep.subr.bf16.mxu0 0
        %1261 = vmatpush1.bf16.xpose.msra.mxu0 0
        %1262 = vmatprep.subr.bf16.mxu0 0
        %1263 = vmatpush1.bf16.xpose.msra.mxu0 0
        %1264 = vmatprep.subr.bf16.mxu0 0
        %1265 = vmatpush1.bf16.xpose.msra.mxu0 0
        %1266 = vmatprep.mubr.bf16.mxu0 0
        %1267 = vmatmul.mubr.bf16.gmra.mrb[0].mxu0 %v1229
        %v1268 = vpop.f32.mrb[0].mxu0
        %v1269 = vadd.f32 %v731, %v1268
        %v1270 = vpop.f32.mrb[0].mxu0
        %v1271 = vpop.f32.mrb[0].mxu0
        %v1272 = vpop.f32.mrb[0].mxu0
        %1273 = vdwg.mxu0
        %v1274 = vsel %vm737, %v1219, -inf
        %1275 = vmax.xlane.f32.xlu0 %v1274
        %v1276 = vpop.xlane.xlu0 %1275
        %v1277 = vsel %vm737, %v1269, -inf
        %1278 = vmax.xlane.f32.xlu0 %v1277
        %v1279 = vpop.xlane.xlu0 %1278
        %v1280 = vsub.f32 %v1219, %v1276
        %v1281 = vsub.f32 %v1269, %v1279
        %v1282 = vmul.f32 %v1280, 1.442695
        %v1283 = vpow.pop %v1282
        %v1284 = vmul.f32 %v1281, 1.442695
        %v1285 = vpow.pop %v1284
        %v1286 = vsel %vm737, %v1283, 0.0
        %1287 = vadd.xlane.f32.xlu0 %v1286
        %v1288 = vpop.xlane.xlu0 %1287
        %v1289 = vsel %vm737, %v1285, 0.0
        %1290 = vadd.xlane.f32.xlu0 %v1289
        %v1291 = vpop.xlane.xlu0 %1290
        %v1292 = vrcp.pop %v1288
        %v1293 = vrcp.pop %v1291
        %v1294 = vmul.f32 %v1283, %v1292
        %v1295 = vmul.f32 %v1285, %v1293
        %v1296 = vpack.c.bf16 %v1294, %v1294
        %v1297 = vpack.c.bf16 %v1295, %v1295
        %1298 = vrot.lane.b32.xlu0 %v732, 48
        %v1299 = vpop.permute.xlu0 %1298
        %v1301 = vsel %vm737, %v1296, 0
        %v1304 = vsel %vm862, %v1299, 0
        %1306 = vmatprep.subr.bf16.mxu0 0
        %1307 = vmatpush1.bf16.msra.mxu0 %v1304
        %1308 = vmatprep.subr.bf16.mxu0 0
        %1309 = vmatpush1.bf16.msra.mxu0 0
        %1310 = vmatprep.subr.bf16.mxu0 0
        %1311 = vmatpush1.bf16.msra.mxu0 0
        %1312 = vmatprep.subr.bf16.mxu0 0
        %1313 = vmatpush1.bf16.msra.mxu0 0
        %1314 = vmatprep.subr.bf16.mxu0 0
        %1315 = vmatpush1.bf16.msra.mxu0 0
        %1316 = vmatprep.subr.bf16.mxu0 0
        %1317 = vmatpush1.bf16.msra.mxu0 0
        %1318 = vmatprep.subr.bf16.mxu0 0
        %1319 = vmatpush1.bf16.msra.mxu0 0
        %1320 = vmatprep.subr.bf16.mxu0 0
        %1321 = vmatpush1.bf16.msra.mxu0 0
        %1322 = vmatprep.subr.bf16.mxu0 0
        %1323 = vmatpush1.bf16.msra.mxu0 0
        %1324 = vmatprep.subr.bf16.mxu0 0
        %1325 = vmatpush1.bf16.msra.mxu0 0
        %1326 = vmatprep.subr.bf16.mxu0 0
        %1327 = vmatpush1.bf16.msra.mxu0 0
        %1328 = vmatprep.subr.bf16.mxu0 0
        %1329 = vmatpush1.bf16.msra.mxu0 0
        %1330 = vmatprep.subr.bf16.mxu0 0
        %1331 = vmatpush1.bf16.msra.mxu0 0
        %1332 = vmatprep.subr.bf16.mxu0 0
        %1333 = vmatpush1.bf16.msra.mxu0 0
        %1334 = vmatprep.subr.bf16.mxu0 0
        %1335 = vmatpush1.bf16.msra.mxu0 0
        %1336 = vmatprep.subr.bf16.mxu0 0
        %1337 = vmatpush1.bf16.msra.mxu0 0
        %1338 = vmatprep.mubr.bf16.mxu0 0
        %1339 = vmatmul.mubr.bf16.gmra.mrb[0].mxu0 %v1301
        %v1340 = vpop.f32.mrb[0].mxu0
        %v1341 = vadd.f32 0.0, %v1340
        %v1342 = vpop.f32.mrb[0].mxu0
        %v1343 = vpop.f32.mrb[0].mxu0
        %v1344 = vpop.f32.mrb[0].mxu0
        %1345 = vdwg.mxu0
        %1346 = vrot.lane.b32.xlu0 %v733, 48
        %v1347 = vpop.permute.xlu0 %1346
        %v1349 = vsel %vm737, %v1297, 0
        %v1352 = vsel %vm862, %v1347, 0
        %1354 = vmatprep.subr.bf16.mxu0 0
        %1355 = vmatpush1.bf16.msra.mxu0 %v1352
        %1356 = vmatprep.subr.bf16.mxu0 0
        %1357 = vmatpush1.bf16.msra.mxu0 0
        %1358 = vmatprep.subr.bf16.mxu0 0
        %1359 = vmatpush1.bf16.msra.mxu0 0
        %1360 = vmatprep.subr.bf16.mxu0 0
        %1361 = vmatpush1.bf16.msra.mxu0 0
        %1362 = vmatprep.subr.bf16.mxu0 0
        %1363 = vmatpush1.bf16.msra.mxu0 0
        %1364 = vmatprep.subr.bf16.mxu0 0
        %1365 = vmatpush1.bf16.msra.mxu0 0
        %1366 = vmatprep.subr.bf16.mxu0 0
        %1367 = vmatpush1.bf16.msra.mxu0 0
        %1368 = vmatprep.subr.bf16.mxu0 0
        %1369 = vmatpush1.bf16.msra.mxu0 0
        %1370 = vmatprep.subr.bf16.mxu0 0
        %1371 = vmatpush1.bf16.msra.mxu0 0
        %1372 = vmatprep.subr.bf16.mxu0 0
        %1373 = vmatpush1.bf16.msra.mxu0 0
        %1374 = vmatprep.subr.bf16.mxu0 0
        %1375 = vmatpush1.bf16.msra.mxu0 0
        %1376 = vmatprep.subr.bf16.mxu0 0
        %1377 = vmatpush1.bf16.msra.mxu0 0
        %1378 = vmatprep.subr.bf16.mxu0 0
        %1379 = vmatpush1.bf16.msra.mxu0 0
        %1380 = vmatprep.subr.bf16.mxu0 0
        %1381 = vmatpush1.bf16.msra.mxu0 0
        %1382 = vmatprep.subr.bf16.mxu0 0
        %1383 = vmatpush1.bf16.msra.mxu0 0
        %1384 = vmatprep.subr.bf16.mxu0 0
        %1385 = vmatpush1.bf16.msra.mxu0 0
        %1386 = vmatprep.mubr.bf16.mxu0 0
        %1387 = vmatmul.mubr.bf16.gmra.mrb[0].mxu0 %v1349
        %v1388 = vpop.f32.mrb[0].mxu0
        %v1389 = vadd.f32 0.0, %v1388
        %v1390 = vpop.f32.mrb[0].mxu0
        %v1391 = vpop.f32.mrb[0].mxu0
        %v1392 = vpop.f32.mrb[0].mxu0
        %1393 = vdwg.mxu0
        %1394 = vrot.lane.b32.xlu0 %v732, 104
        %v1395 = vpop.permute.xlu0 %1394
        %1396 = vrot.lane.b32.xlu0 %v732, 72
        %v1397 = vpop.permute.xlu0 %1396
        %v1399 = vsel %vm737, %v1395, 0
        %v1402 = vsel %vm737, %v1397, 0
        %1404 = vmatprep.subr.bf16.mxu0 0
        %1405 = vmatpush1.bf16.xpose.msra.mxu0 %v1402
        %1406 = vmatprep.subr.bf16.mxu0 0
        %1407 = vmatpush1.bf16.xpose.msra.mxu0 0
        %1408 = vmatprep.subr.bf16.mxu0 0
        %1409 = vmatpush1.bf16.xpose.msra.mxu0 0
        %1410 = vmatprep.subr.bf16.mxu0 0
        %1411 = vmatpush1.bf16.xpose.msra.mxu0 0
        %1412 = vmatprep.subr.bf16.mxu0 0
        %1413 = vmatpush1.bf16.xpose.msra.mxu0 0
        %1414 = vmatprep.subr.bf16.mxu0 0
        %1415 = vmatpush1.bf16.xpose.msra.mxu0 0
        %1416 = vmatprep.subr.bf16.mxu0 0
        %1417 = vmatpush1.bf16.xpose.msra.mxu0 0
        %1418 = vmatprep.subr.bf16.mxu0 0
        %1419 = vmatpush1.bf16.xpose.msra.mxu0 0
        %1420 = vmatprep.subr.bf16.mxu0 0
        %1421 = vmatpush1.bf16.xpose.msra.mxu0 0
        %1422 = vmatprep.subr.bf16.mxu0 0
        %1423 = vmatpush1.bf16.xpose.msra.mxu0 0
        %1424 = vmatprep.subr.bf16.mxu0 0
        %1425 = vmatpush1.bf16.xpose.msra.mxu0 0
        %1426 = vmatprep.subr.bf16.mxu0 0
        %1427 = vmatpush1.bf16.xpose.msra.mxu0 0
        %1428 = vmatprep.subr.bf16.mxu0 0
        %1429 = vmatpush1.bf16.xpose.msra.mxu0 0
        %1430 = vmatprep.subr.bf16.mxu0 0
        %1431 = vmatpush1.bf16.xpose.msra.mxu0 0
        %1432 = vmatprep.subr.bf16.mxu0 0
        %1433 = vmatpush1.bf16.xpose.msra.mxu0 0
        %1434 = vmatprep.subr.bf16.mxu0 0
        %1435 = vmatpush1.bf16.xpose.msra.mxu0 0
        %1436 = vmatprep.mubr.bf16.mxu0 0
        %1437 = vmatmul.mubr.bf16.gmra.mrb[0].mxu0 %v1399
        %v1438 = vpop.f32.mrb[0].mxu0
        %v1439 = vadd.f32 %v730, %v1438
        %v1440 = vpop.f32.mrb[0].mxu0
        %v1441 = vpop.f32.mrb[0].mxu0
        %v1442 = vpop.f32.mrb[0].mxu0
        %1443 = vdwg.mxu0
        %1444 = vrot.lane.b32.xlu0 %v733, 104
        %v1445 = vpop.permute.xlu0 %1444
        %1446 = vrot.lane.b32.xlu0 %v733, 72
        %v1447 = vpop.permute.xlu0 %1446
        %v1449 = vsel %vm737, %v1445, 0
        %v1452 = vsel %vm737, %v1447, 0
        %1454 = vmatprep.subr.bf16.mxu0 0
        %1455 = vmatpush1.bf16.xpose.msra.mxu0 %v1452
        %1456 = vmatprep.subr.bf16.mxu0 0
        %1457 = vmatpush1.bf16.xpose.msra.mxu0 0
        %1458 = vmatprep.subr.bf16.mxu0 0
        %1459 = vmatpush1.bf16.xpose.msra.mxu0 0
        %1460 = vmatprep.subr.bf16.mxu0 0
        %1461 = vmatpush1.bf16.xpose.msra.mxu0 0
        %1462 = vmatprep.subr.bf16.mxu0 0
        %1463 = vmatpush1.bf16.xpose.msra.mxu0 0
        %1464 = vmatprep.subr.bf16.mxu0 0
        %1465 = vmatpush1.bf16.xpose.msra.mxu0 0
        %1466 = vmatprep.subr.bf16.mxu0 0
        %1467 = vmatpush1.bf16.xpose.msra.mxu0 0
        %1468 = vmatprep.subr.bf16.mxu0 0
        %1469 = vmatpush1.bf16.xpose.msra.mxu0 0
        %1470 = vmatprep.subr.bf16.mxu0 0
        %1471 = vmatpush1.bf16.xpose.msra.mxu0 0
        %1472 = vmatprep.subr.bf16.mxu0 0
        %1473 = vmatpush1.bf16.xpose.msra.mxu0 0
        %1474 = vmatprep.subr.bf16.mxu0 0
        %1475 = vmatpush1.bf16.xpose.msra.mxu0 0
        %1476 = vmatprep.subr.bf16.mxu0 0
        %1477 = vmatpush1.bf16.xpose.msra.mxu0 0
        %1478 = vmatprep.subr.bf16.mxu0 0
        %1479 = vmatpush1.bf16.xpose.msra.mxu0 0
        %1480 = vmatprep.subr.bf16.mxu0 0
        %1481 = vmatpush1.bf16.xpose.msra.mxu0 0
        %1482 = vmatprep.subr.bf16.mxu0 0
        %1483 = vmatpush1.bf16.xpose.msra.mxu0 0
        %1484 = vmatprep.subr.bf16.mxu0 0
        %1485 = vmatpush1.bf16.xpose.msra.mxu0 0
        %1486 = vmatprep.mubr.bf16.mxu0 0
        %1487 = vmatmul.mubr.bf16.gmra.mrb[0].mxu0 %v1449
        %v1488 = vpop.f32.mrb[0].mxu0
        %v1489 = vadd.f32 %v731, %v1488
        %v1490 = vpop.f32.mrb[0].mxu0
        %v1491 = vpop.f32.mrb[0].mxu0
        %v1492 = vpop.f32.mrb[0].mxu0
        %1493 = vdwg.mxu0
        %v1494 = vsel %vm737, %v1439, -inf
        %1495 = vmax.xlane.f32.xlu0 %v1494
        %v1496 = vpop.xlane.xlu0 %1495
        %v1497 = vsel %vm737, %v1489, -inf
        %1498 = vmax.xlane.f32.xlu0 %v1497
        %v1499 = vpop.xlane.xlu0 %1498
        %v1500 = vsub.f32 %v1439, %v1496
        %v1501 = vsub.f32 %v1489, %v1499
        %v1502 = vmul.f32 %v1500, 1.442695
        %v1503 = vpow.pop %v1502
        %v1504 = vmul.f32 %v1501, 1.442695
        %v1505 = vpow.pop %v1504
        %v1506 = vsel %vm737, %v1503, 0.0
        %1507 = vadd.xlane.f32.xlu0 %v1506
        %v1508 = vpop.xlane.xlu0 %1507
        %v1509 = vsel %vm737, %v1505, 0.0
        %1510 = vadd.xlane.f32.xlu0 %v1509
        %v1511 = vpop.xlane.xlu0 %1510
        %v1512 = vrcp.pop %v1508
        %v1513 = vrcp.pop %v1511
        %v1514 = vmul.f32 %v1503, %v1512
        %v1515 = vmul.f32 %v1505, %v1513
        %v1516 = vpack.c.bf16 %v1514, %v1514
        %v1517 = vpack.c.bf16 %v1515, %v1515
        %1518 = vrot.lane.b32.xlu0 %v732, 40
        %v1519 = vpop.permute.xlu0 %1518
        %v1521 = vsel %vm737, %v1516, 0
        %v1524 = vsel %vm862, %v1519, 0
        %1526 = vmatprep.subr.bf16.mxu0 0
        %1527 = vmatpush1.bf16.msra.mxu0 %v1524
        %1528 = vmatprep.subr.bf16.mxu0 0
        %1529 = vmatpush1.bf16.msra.mxu0 0
        %1530 = vmatprep.subr.bf16.mxu0 0
        %1531 = vmatpush1.bf16.msra.mxu0 0
        %1532 = vmatprep.subr.bf16.mxu0 0
        %1533 = vmatpush1.bf16.msra.mxu0 0
        %1534 = vmatprep.subr.bf16.mxu0 0
        %1535 = vmatpush1.bf16.msra.mxu0 0
        %1536 = vmatprep.subr.bf16.mxu0 0
        %1537 = vmatpush1.bf16.msra.mxu0 0
        %1538 = vmatprep.subr.bf16.mxu0 0
        %1539 = vmatpush1.bf16.msra.mxu0 0
        %1540 = vmatprep.subr.bf16.mxu0 0
        %1541 = vmatpush1.bf16.msra.mxu0 0
        %1542 = vmatprep.subr.bf16.mxu0 0
        %1543 = vmatpush1.bf16.msra.mxu0 0
        %1544 = vmatprep.subr.bf16.mxu0 0
        %1545 = vmatpush1.bf16.msra.mxu0 0
        %1546 = vmatprep.subr.bf16.mxu0 0
        %1547 = vmatpush1.bf16.msra.mxu0 0
        %1548 = vmatprep.subr.bf16.mxu0 0
        %1549 = vmatpush1.bf16.msra.mxu0 0
        %1550 = vmatprep.subr.bf16.mxu0 0
        %1551 = vmatpush1.bf16.msra.mxu0 0
        %1552 = vmatprep.subr.bf16.mxu0 0
        %1553 = vmatpush1.bf16.msra.mxu0 0
        %1554 = vmatprep.subr.bf16.mxu0 0
        %1555 = vmatpush1.bf16.msra.mxu0 0
        %1556 = vmatprep.subr.bf16.mxu0 0
        %1557 = vmatpush1.bf16.msra.mxu0 0
        %1558 = vmatprep.mubr.bf16.mxu0 0
        %1559 = vmatmul.mubr.bf16.gmra.mrb[0].mxu0 %v1521
        %v1560 = vpop.f32.mrb[0].mxu0
        %v1561 = vadd.f32 0.0, %v1560
        %v1562 = vpop.f32.mrb[0].mxu0
        %v1563 = vpop.f32.mrb[0].mxu0
        %v1564 = vpop.f32.mrb[0].mxu0
        %1565 = vdwg.mxu0
        %1566 = vrot.lane.b32.xlu0 %v733, 40
        %v1567 = vpop.permute.xlu0 %1566
        %v1569 = vsel %vm737, %v1517, 0
        %v1572 = vsel %vm862, %v1567, 0
        %1574 = vmatprep.subr.bf16.mxu0 0
        %1575 = vmatpush1.bf16.msra.mxu0 %v1572
        %1576 = vmatprep.subr.bf16.mxu0 0
        %1577 = vmatpush1.bf16.msra.mxu0 0
        %1578 = vmatprep.subr.bf16.mxu0 0
        %1579 = vmatpush1.bf16.msra.mxu0 0
        %1580 = vmatprep.subr.bf16.mxu0 0
        %1581 = vmatpush1.bf16.msra.mxu0 0
        %1582 = vmatprep.subr.bf16.mxu0 0
        %1583 = vmatpush1.bf16.msra.mxu0 0
        %1584 = vmatprep.subr.bf16.mxu0 0
        %1585 = vmatpush1.bf16.msra.mxu0 0
        %1586 = vmatprep.subr.bf16.mxu0 0
        %1587 = vmatpush1.bf16.msra.mxu0 0
        %1588 = vmatprep.subr.bf16.mxu0 0
        %1589 = vmatpush1.bf16.msra.mxu0 0
        %1590 = vmatprep.subr.bf16.mxu0 0
        %1591 = vmatpush1.bf16.msra.mxu0 0
        %1592 = vmatprep.subr.bf16.mxu0 0
        %1593 = vmatpush1.bf16.msra.mxu0 0
        %1594 = vmatprep.subr.bf16.mxu0 0
        %1595 = vmatpush1.bf16.msra.mxu0 0
        %1596 = vmatprep.subr.bf16.mxu0 0
        %1597 = vmatpush1.bf16.msra.mxu0 0
        %1598 = vmatprep.subr.bf16.mxu0 0
        %1599 = vmatpush1.bf16.msra.mxu0 0
        %1600 = vmatprep.subr.bf16.mxu0 0
        %1601 = vmatpush1.bf16.msra.mxu0 0
        %1602 = vmatprep.subr.bf16.mxu0 0
        %1603 = vmatpush1.bf16.msra.mxu0 0
        %1604 = vmatprep.subr.bf16.mxu0 0
        %1605 = vmatpush1.bf16.msra.mxu0 0
        %1606 = vmatprep.mubr.bf16.mxu0 0
        %1607 = vmatmul.mubr.bf16.gmra.mrb[0].mxu0 %v1569
        %v1608 = vpop.f32.mrb[0].mxu0
        %v1609 = vadd.f32 0.0, %v1608
        %v1610 = vpop.f32.mrb[0].mxu0
        %v1611 = vpop.f32.mrb[0].mxu0
        %v1612 = vpop.f32.mrb[0].mxu0
        %1613 = vdwg.mxu0
        %1616 = vrot.lane.b32.xlu0 %v1121, 8
        %v1617 = vpop.permute.xlu0 %1616
        %1618 = vrot.lane.b32.xlu0 %v1169, 8
        %v1619 = vpop.permute.xlu0 %1618
        %1624 = vrot.lane.b32.xlu0 %v1341, 16
        %v1625 = vpop.permute.xlu0 %1624
        %1626 = vrot.lane.b32.xlu0 %v1389, 16
        %v1627 = vpop.permute.xlu0 %1626
        %1632 = vrot.lane.b32.xlu0 %v1561, 24
        %v1633 = vpop.permute.xlu0 %1632
        %1634 = vrot.lane.b32.xlu0 %v1609, 24
        %v1635 = vpop.permute.xlu0 %1634
        %v1638 = vsel %vm737, %v901, %v1617
        %v1639 = vsel %vm737, %v949, %v1619
        %vm1640 = vcmask 130048
        %v1641 = vsel %vm1640, %v1638, %v1625
        %v1642 = vsel %vm1640, %v1639, %v1627
        %vm1643 = vcmask 195584
        %v1644 = vsel %vm1643, %v1641, %v1633
        %v1645 = vsel %vm1643, %v1642, %v1635
        %v1646 = vpack.c.bf16 %v1645, %v1644
        %v1647 = vlaneseq
        %v1648 = vshrl.u32 %v1647, 7
        %v1649 = vsub.s32 0, %v1648
        %v1650 = vrot.slane %v630, %v1649
        %v1655 = vunpack.c.l.b16 %v626
        %v1656 = vunpack.c.l.b16 %v627
        %v1657 = vunpack.c.l.b16 %v628
        %v1658 = vunpack.c.l.b16 %v629
        %v1659 = vpack.c.b16 %v1656, %v1655
        %v1660 = vpack.c.b16 %v1658, %v1657
        %v1664 = vsel %vm663, %v1646, 0
        %1666 = vmatprep.subr.bf16.mxu0 0
        %1667 = vmatpush1.bf16.msra.mxu0 %v1659
        %1668 = vmatprep.subr.bf16.mxu0 0
        %1669 = vmatpush1.bf16.msra.mxu0 %v1660
        %1670 = vmatprep.subr.bf16.mxu0 0
        %1671 = vmatpush1.bf16.msra.mxu0 0
        %1672 = vmatprep.subr.bf16.mxu0 0
        %1673 = vmatpush1.bf16.msra.mxu0 0
        %1674 = vmatprep.subr.bf16.mxu0 0
        %1675 = vmatpush1.bf16.msra.mxu0 0
        %1676 = vmatprep.subr.bf16.mxu0 0
        %1677 = vmatpush1.bf16.msra.mxu0 0
        %1678 = vmatprep.subr.bf16.mxu0 0
        %1679 = vmatpush1.bf16.msra.mxu0 0
        %1680 = vmatprep.subr.bf16.mxu0 0
        %1681 = vmatpush1.bf16.msra.mxu0 0
        %1682 = vmatprep.subr.bf16.mxu0 0
        %1683 = vmatpush1.bf16.msra.mxu0 0
        %1684 = vmatprep.subr.bf16.mxu0 0
        %1685 = vmatpush1.bf16.msra.mxu0 0
        %1686 = vmatprep.subr.bf16.mxu0 0
        %1687 = vmatpush1.bf16.msra.mxu0 0
        %1688 = vmatprep.subr.bf16.mxu0 0
        %1689 = vmatpush1.bf16.msra.mxu0 0
        %1690 = vmatprep.subr.bf16.mxu0 0
        %1691 = vmatpush1.bf16.msra.mxu0 0
        %1692 = vmatprep.subr.bf16.mxu0 0
        %1693 = vmatpush1.bf16.msra.mxu0 0
        %1694 = vmatprep.subr.bf16.mxu0 0
        %1695 = vmatpush1.bf16.msra.mxu0 0
        %1696 = vmatprep.subr.bf16.mxu0 0
        %1697 = vmatpush1.bf16.msra.mxu0 0
        %1698 = vmatprep.mubr.bf16.mxu0 0
        %1699 = vmatmul.mubr.bf16.gmra.mrb[0].mxu0 %v1664
        %v1700 = vpop.f32.mrb[0].mxu0
        %v1701 = vadd.f32 %v1650, %v1700
        %v1702 = vpop.f32.mrb[0].mxu0
        %v1703 = vpop.f32.mrb[0].mxu0
        %v1704 = vadd.f32 %v1650, %v1703
        %v1705 = vpop.f32.mrb[0].mxu0
        %1706 = vdwg.mxu0
        %v1707 = vadd.f32 %v619, %v1701
        %v1708 = vadd.f32 %v620, %v1704
        %v1709 = vsel %vm663, %v1707, 0.0
        %1710 = vadd.xlane.f32.xlu0 %v1709
        %v1711 = vpop.xlane.xlu0 %1710
        %v1712 = vsel %vm663, %v1708, 0.0
        %1713 = vadd.xlane.f32.xlu0 %v1712
        %v1714 = vpop.xlane.xlu0 %1713
        %v1715 = vrcp.pop 32.0
        %v1716 = vmul.f32 %v1711, %v1715
        %v1717 = vmul.f32 %v1714, %v1715
        %v1718 = vsub.f32 %v1707, %v1716
        %v1719 = vsub.f32 %v1708, %v1717
        %v1720 = vmul.f32 %v1718, %v1718
        %v1721 = vmul.f32 %v1719, %v1719
        %v1722 = vsel %vm663, %v1720, 0.0
        %1723 = vadd.xlane.f32.xlu0 %v1722
        %v1724 = vpop.xlane.xlu0 %1723
        %v1725 = vsel %vm663, %v1721, 0.0
        %1726 = vadd.xlane.f32.xlu0 %v1725
        %v1727 = vpop.xlane.xlu0 %1726
        %v1728 = vmul.f32 %v1724, %v1715
        %v1729 = vmul.f32 %v1727, %v1715
        %v1730 = vadd.f32 %v1728, 1e-05
        %v1731 = vadd.f32 %v1729, 1e-05
        %v1732 = vrsqrt.pop %v1730
        %v1733 = vrsqrt.pop %v1731
        %v1734 = vmul.f32 %v1718, %v1732
        %v1735 = vmul.f32 %v1719, %v1733
        %v1736 = vlaneseq
        %v1737 = vshrl.u32 %v1736, 7
        %v1738 = vsub.s32 1, %v1737
        %v1739 = vrot.slane %v630, %v1738
        %v1740 = vmul.f32 %v1734, %v1739
        %v1741 = vmul.f32 %v1735, %v1739
        %v1742 = vlaneseq
        %v1743 = vshrl.u32 %v1742, 7
        %v1744 = vsub.s32 2, %v1743
        %v1745 = vrot.slane %v630, %v1744
        %v1746 = vadd.f32 %v1740, %v1745
        %v1747 = vadd.f32 %v1741, %v1745
        %v1748 = vpack.c.bf16 %v1747, %v1746
        %v1750 = vlaneseq
        %v1751 = vshrl.u32 %v1750, 7
        %v1752 = vsub.s32 0, %v1751
        %v1753 = vrot.slane %v635, %v1752
        %v1759 = vunpack.c.l.b16 %v631
        %v1760 = vunpack.c.l.b16 %v632
        %v1761 = vunpack.c.l.b16 %v633
        %v1762 = vunpack.c.l.b16 %v634
        %v1763 = vpack.c.b16 %v1760, %v1759
        %v1764 = vpack.c.b16 %v1762, %v1761
        %v1768 = vsel %vm663, %v1748, 0
        %1770 = vmatprep.subr.bf16.mxu0 0
        %1771 = vmatpush1.bf16.msra.mxu0 %v1763
        %1772 = vmatprep.subr.bf16.mxu0 0
        %1773 = vmatpush1.bf16.msra.mxu0 %v1764
        %1774 = vmatprep.subr.bf16.mxu0 0
        %1775 = vmatpush1.bf16.msra.mxu0 0
        %1776 = vmatprep.subr.bf16.mxu0 0
        %1777 = vmatpush1.bf16.msra.mxu0 0
        %1778 = vmatprep.subr.bf16.mxu0 0
        %1779 = vmatpush1.bf16.msra.mxu0 0
        %1780 = vmatprep.subr.bf16.mxu0 0
        %1781 = vmatpush1.bf16.msra.mxu0 0
        %1782 = vmatprep.subr.bf16.mxu0 0
        %1783 = vmatpush1.bf16.msra.mxu0 0
        %1784 = vmatprep.subr.bf16.mxu0 0
        %1785 = vmatpush1.bf16.msra.mxu0 0
        %1786 = vmatprep.subr.bf16.mxu0 0
        %1787 = vmatpush1.bf16.msra.mxu0 0
        %1788 = vmatprep.subr.bf16.mxu0 0
        %1789 = vmatpush1.bf16.msra.mxu0 0
        %1790 = vmatprep.subr.bf16.mxu0 0
        %1791 = vmatpush1.bf16.msra.mxu0 0
        %1792 = vmatprep.subr.bf16.mxu0 0
        %1793 = vmatpush1.bf16.msra.mxu0 0
        %1794 = vmatprep.subr.bf16.mxu0 0
        %1795 = vmatpush1.bf16.msra.mxu0 0
        %1796 = vmatprep.subr.bf16.mxu0 0
        %1797 = vmatpush1.bf16.msra.mxu0 0
        %1798 = vmatprep.subr.bf16.mxu0 0
        %1799 = vmatpush1.bf16.msra.mxu0 0
        %1800 = vmatprep.subr.bf16.mxu0 0
        %1801 = vmatpush1.bf16.msra.mxu0 0
        %1802 = vmatprep.mubr.bf16.mxu0 0
        %1803 = vmatmul.mubr.bf16.gmra.mrb[0].mxu0 %v1768
        %v1804 = vpop.f32.mrb[0].mxu0
        %v1805 = vadd.f32 %v1753, %v1804
        %v1806 = vpop.f32.mrb[0].mxu0
        %v1807 = vpop.f32.mrb[0].mxu0
        %v1808 = vadd.f32 %v1753, %v1807
        %v1809 = vpop.f32.mrb[0].mxu0
        %1810 = vdwg.mxu0
        %v1811 = vmax.f32 %v1805, 0.0
        %v1812 = vmax.f32 %v1808, 0.0
        %v1813 = vpack.c.bf16 %v1812, %v1811
        %v1814 = vlaneseq
        %v1815 = vshrl.u32 %v1814, 7
        %v1816 = vsub.s32 5, %v1815
        %v1817 = vrot.slane %v630, %v1816
        %v1826 = vunpack.c.l.b16 %v636
        %v1827 = vunpack.c.l.b16 %v637
        %v1828 = vunpack.c.l.b16 %v638
        %v1829 = vunpack.c.l.b16 %v639
        %v1830 = vunpack.c.l.b16 %v640
        %v1831 = vunpack.c.l.b16 %v641
        %v1832 = vunpack.c.l.b16 %v642
        %v1833 = vunpack.c.l.b16 %v643
        %v1834 = vpack.c.b16 %v1827, %v1826
        %v1835 = vpack.c.b16 %v1829, %v1828
        %v1836 = vpack.c.b16 %v1831, %v1830
        %v1837 = vpack.c.b16 %v1833, %v1832
        %vm1842 = vcmask 523264
        %v1844 = vsel %vm1842, %v1813, 0
        %1846 = vmatprep.subr.bf16.mxu0 0
        %1847 = vmatpush1.bf16.msra.mxu0 %v1834
        %1848 = vmatprep.subr.bf16.mxu0 0
        %1849 = vmatpush1.bf16.msra.mxu0 %v1835
        %1850 = vmatprep.subr.bf16.mxu0 0
        %1851 = vmatpush1.bf16.msra.mxu0 %v1836
        %1852 = vmatprep.subr.bf16.mxu0 0
        %1853 = vmatpush1.bf16.msra.mxu0 %v1837
        %1854 = vmatprep.subr.bf16.mxu0 0
        %1855 = vmatpush1.bf16.msra.mxu0 0
        %1856 = vmatprep.subr.bf16.mxu0 0
        %1857 = vmatpush1.bf16.msra.mxu0 0
        %1858 = vmatprep.subr.bf16.mxu0 0
        %1859 = vmatpush1.bf16.msra.mxu0 0
        %1860 = vmatprep.subr.bf16.mxu0 0
        %1861 = vmatpush1.bf16.msra.mxu0 0
        %1862 = vmatprep.subr.bf16.mxu0 0
        %1863 = vmatpush1.bf16.msra.mxu0 0
        %1864 = vmatprep.subr.bf16.mxu0 0
        %1865 = vmatpush1.bf16.msra.mxu0 0
        %1866 = vmatprep.subr.bf16.mxu0 0
        %1867 = vmatpush1.bf16.msra.mxu0 0
        %1868 = vmatprep.subr.bf16.mxu0 0
        %1869 = vmatpush1.bf16.msra.mxu0 0
        %1870 = vmatprep.subr.bf16.mxu0 0
        %1871 = vmatpush1.bf16.msra.mxu0 0
        %1872 = vmatprep.subr.bf16.mxu0 0
        %1873 = vmatpush1.bf16.msra.mxu0 0
        %1874 = vmatprep.subr.bf16.mxu0 0
        %1875 = vmatpush1.bf16.msra.mxu0 0
        %1876 = vmatprep.subr.bf16.mxu0 0
        %1877 = vmatpush1.bf16.msra.mxu0 0
        %1878 = vmatprep.mubr.bf16.mxu0 0
        %1879 = vmatmul.mubr.bf16.gmra.mrb[0].mxu0 %v1844
        %v1880 = vpop.f32.mrb[0].mxu0
        %v1881 = vadd.f32 %v1817, %v1880
        %v1882 = vpop.f32.mrb[0].mxu0
        %v1883 = vpop.f32.mrb[0].mxu0
        %v1884 = vadd.f32 %v1817, %v1883
        %v1885 = vpop.f32.mrb[0].mxu0
        %1886 = vdwg.mxu0
        %v1887 = vadd.f32 %v1746, %v1881
        %v1888 = vadd.f32 %v1747, %v1884
        %v1889 = vsel %vm663, %v1887, 0.0
        %1890 = vadd.xlane.f32.xlu0 %v1889
        %v1891 = vpop.xlane.xlu0 %1890
        %v1892 = vsel %vm663, %v1888, 0.0
        %1893 = vadd.xlane.f32.xlu0 %v1892
        %v1894 = vpop.xlane.xlu0 %1893
        %v1895 = vmul.f32 %v1891, %v1715
        %v1896 = vmul.f32 %v1894, %v1715
        %v1897 = vsub.f32 %v1887, %v1895
        %v1898 = vsub.f32 %v1888, %v1896
        %v1899 = vmul.f32 %v1897, %v1897
        %v1900 = vmul.f32 %v1898, %v1898
        %v1901 = vsel %vm663, %v1899, 0.0
        %1902 = vadd.xlane.f32.xlu0 %v1901
        %v1903 = vpop.xlane.xlu0 %1902
        %v1904 = vsel %vm663, %v1900, 0.0
        %1905 = vadd.xlane.f32.xlu0 %v1904
        %v1906 = vpop.xlane.xlu0 %1905
        %v1907 = vmul.f32 %v1903, %v1715
        %v1908 = vmul.f32 %v1906, %v1715
        %v1909 = vadd.f32 %v1907, 1e-05
        %v1910 = vadd.f32 %v1908, 1e-05
        %v1911 = vrsqrt.pop %v1909
        %v1912 = vrsqrt.pop %v1910
        %v1913 = vmul.f32 %v1897, %v1911
        %v1914 = vmul.f32 %v1898, %v1912
        %v1915 = vlaneseq
        %v1916 = vshrl.u32 %v1915, 7
        %v1917 = vsub.s32 3, %v1916
        %v1918 = vrot.slane %v630, %v1917
        %v1919 = vmul.f32 %v1913, %v1918
        %v1920 = vmul.f32 %v1914, %v1918
        %v1921 = vlaneseq
        %v1922 = vshrl.u32 %v1921, 7
        %v1923 = vsub.s32 4, %v1922
        %v1924 = vrot.slane %v630, %v1923
        %v1925 = vadd.f32 %v1919, %v1924
        %v1926 = vadd.f32 %v1920, %v1924
        %1927 = vst.msk [vmem:[#allocation2] sm:$0xff] %vm663, %v1925
        %1928 = vst.msk [vmem:[#allocation2 + $0x8] sm:$0xff] %vm663, %v1926
        %p1929 = scmp.eq.s32.totalorder %s28, 1
        // Predicated region
        $region97: #{cross_attention_transformer_forward.1} parent=55 // pred_check
          %p1930 = pneg %p1929
        $region98: #{cross_attention_transformer_forward.1} parent=55 // pred_check_branch
          %1932 = sbr.rel (%p1930) target = $region100
        $region99: #{cross_attention_transformer_forward.1} parent=55 // pred_region
          %1933 = vst.msk [vmem:[#allocation15] sm:$0xff] %vm663, %v1925
          %1934 = vst.msk [vmem:[#allocation15 + $0x8] sm:$0xff] %vm663, %v1926
        $region100: #{cross_attention_transformer_forward.1} parent=55 // pred_fallthru
          _
        // Predicated region
        $region101: #{cross_attention_transformer_forward.1} parent=55 // pred_check
          %p1935 = pneg %p287
        $region102: #{cross_attention_transformer_forward.1} parent=55 // pred_check_branch
          %1937 = sbr.rel (%p1935) target = $region104
        $region103: #{cross_attention_transformer_forward.1} parent=55 // pred_region
          %s1938 = smul.u32 2, %s27
          %s1940 = ssub.s32 256, 256
          %1941 = vsyncadd [#allocation5], %s1940
          %s1942 = smul.addr %s1938, 128
          %s1943 = scalar_lea.hbm %s9, %s1942
          %s1944 = sshll.u32 [#allocation15], 4
          %s1945 = int_to_ptr.vmem [resolvable:$true] %s1944
          %1950 = dma.vmem_to_hbm [thread:$0]  %s1945, 256, %s1943, [#allocation5], 128, 128, 8
        $region104: #{cross_attention_transformer_forward.1} parent=55 // pred_fallthru
          _
        // Predicated region
        $region105: #{cross_attention_transformer_forward.1} parent=55 // pred_check
          %p1951 = pneg %p287
        $region106: #{cross_attention_transformer_forward.1} parent=55 // pred_check_branch
          %1953 = sbr.rel (%p1951) target = $region108
        $region107: #{cross_attention_transformer_forward.1} parent=55 // pred_region
          %1954 = dma.done [#allocation5], 256
        $region108: #{cross_attention_transformer_forward.1} parent=55 // pred_fallthru
          _
      $region56: #{cross_attention_transformer_forward.1} parent=5 // pred_fallthru
        _
      %p1955 = scmp.le.s32.totalorder 2, %s18
      // Predicated region
      $region109: #{cross_attention_transformer_forward.1} parent=5 // pred_check
        %p1956 = pneg %p1955
      $region110: #{cross_attention_transformer_forward.1} parent=5 // pred_check_branch
        %1958 = sbr.rel (%p1956) target = $region112
      $region111: #{cross_attention_transformer_forward.1} parent=5 // pred_region
        %s1959 = ssub.s32 %s18, 2
      $region112: #{cross_attention_transformer_forward.1} parent=5 // pred_fallthru
        _
    $region6: #{cross_attention_transformer_forward.1} parent=1 // loop_footer
      %s22 = sadd.s32 1, %s18
    $region7: #{cross_attention_transformer_forward.1} parent=1 // loop_footer_branch
      %17 = sbr.rel target = $region3
    $region8: #{cross_attention_transformer_forward.1} parent=1 // loop_exit
      _
    %1960 = vsyncpa [#allocation4], 1
    %s1961 = scalar_lea.sflag [#allocation4], 1
    %1962 = vsyncpa %s1961, 1
    %1963 = vsyncpa [#allocation7], 1
    %1964 = vsyncpa [#allocation5], 1
    %s1965 = scalar_lea.sflag [#allocation5], 1
    %1966 = vsyncpa %s1965, 1

</llo_original>
